<compile_context>
chip_gen: v7x
topology: tpu7x:2x2x1
jax: 0.10.0
libtpu: 0.0.40
codegen_flags: <defaults>
</compile_context>

<pallas_src>
import jax
import jax.numpy as jnp
import numpy as np
from jax.experimental import pallas as pl
from jax.experimental.pallas import tpu as pltpu

# ---- model hyper-parameters (IMUCNNDenoiser defaults) ----------------------
C0 = 16                     # c0;  c1=32, c2=64, c3=128
KS = (7, 7, 7, 7)           # kernel sizes
DS = (4, 4, 4)              # dilations between layers
BN_EPS = 1e-5
_INV_SQRT2 = 0.7071067811865476


def _gelu(x):
    # exact (erf) GELU, matching torch.nn.GELU() default
    return 0.5 * x * (1.0 + jax.lax.erf(x * _INV_SQRT2))


def _left_pad():
    k0, k1, k2, k3 = KS
    d0, d1, d2 = DS
    return (k0 - 1) + d0 * (k1 - 1) + d0 * d1 * (k2 - 1) + d0 * d1 * d2 * (k3 - 1)


# ---- parameter init (deterministic, shapes from __init__) ------------------
def init_params(key, in_dim):
    c0 = C0
    c1, c2, c3 = 2 * c0, 4 * c0, 8 * c0
    layer_cfg = [
        (in_dim, c0, KS[0], 1),
        (c0, c1, KS[1], DS[0]),
        (c1, c2, KS[2], DS[0] * DS[1]),
        (c2, c3, KS[3], DS[0] * DS[1] * DS[2]),
        (c3, in_dim, 1, 1),          # final 1x1 conv, no BN / GELU
    ]
    params = []
    keys = jax.random.split(key, len(layer_cfg) * 6)
    for i, (cin, cout, k, d) in enumerate(layer_cfg):
        kk = keys[i * 6:(i + 1) * 6]
        w = 0.1 * jax.random.normal(kk[0], (cout, cin, k), jnp.float32)   # torch layout (O,I,K)
        b = 0.05 * jax.random.normal(kk[1], (cout,), jnp.float32)
        if i < 4:  # layers followed by BatchNorm1d + GELU
            gamma = 1.0 + 0.1 * jax.random.normal(kk[2], (cout,), jnp.float32)
            beta = 0.1 * jax.random.normal(kk[3], (cout,), jnp.float32)
            mean = 0.1 * jax.random.normal(kk[4], (cout,), jnp.float32)
            var = 1.0 + 0.1 * jax.random.uniform(kk[5], (cout,), jnp.float32)
        else:
            gamma = beta = mean = var = None
        params.append(dict(w=w, b=b, gamma=gamma, beta=beta, mean=mean,
                           var=var, k=k, d=d))
    return params


# ---- Pallas kernel ----------------------------------------------------------
def imu_cnn_denoiser(x, params):
    """x: (B, T, in_dim) float32.  Returns clean_src = x + cnn(x)."""
    B, T, cin = x.shape
    p0 = _left_pad()
    L0 = T + p0

    # per-layer output lengths of the conv chain
    lens = [L0]
    for p in params:
        lens.append(lens[-1] - p['d'] * (p['k'] - 1))
    assert lens[-1] == T

    # channel-major (B, C, T): time goes on the lane axis inside the kernel.
    xc = jnp.transpose(x, (0, 2, 1))

    kernel_inputs = [xc]
    in_specs = [pl.BlockSpec((pl.Squeezed(), cin, T), lambda b: (b, 0, 0))]

    taps = []  # static per-layer metadata used inside the kernel
    for i, p in enumerate(params):
        k, d = p['k'], p['d']
        cout, cin_l, _ = p['w'].shape
        # (Cout, Cin, K) -> (Cout, K*Cin) so W_flat[co, j*Cin + ci] = w[co, ci, j]
        w_flat = jnp.transpose(p['w'], (0, 2, 1)).reshape(cout, k * cin_l)
        w_flat = w_flat.astype(jnp.bfloat16)            # single-pass MXU, f32 acc
        if p['gamma'] is not None:
            # fold BatchNorm (eval / running stats) + conv bias into scale/shift
            scale = p['gamma'] / jnp.sqrt(p['var'] + BN_EPS)
            shift = (p['b'] - p['mean']) * scale + p['beta']
        else:
            scale = jnp.ones_like(p['b'])
            shift = p['b']
        aff = jnp.stack([scale, shift], axis=1)          # (Cout, 2) f32
        kernel_inputs += [w_flat, aff]
        in_specs += [
            pl.BlockSpec((cout, k * cin_l), lambda b: (0, 0)),
            pl.BlockSpec((cout, 2), lambda b: (0, 0)),
        ]
        taps.append((k, d, lens[i + 1], p['gamma'] is not None))

    def kernel(x_ref, *rest):
        param_refs, out_ref = rest[:-1], rest[-1]
        xc_blk = x_ref[...]                              # (Cin, T) f32, lane-dense time
        # ReplicationPad1d((p0, 0)): left-pad with the first time sample (in VMEM).
        left = jnp.broadcast_to(xc_blk[:, :1], (cin, p0))
        h = jnp.concatenate([left, xc_blk], axis=1)      # (Cin, L0) f32

        for li, (k, d, l_out, has_bn_gelu) in enumerate(taps):
            w_ref = param_refs[2 * li]                   # (Cout, K*Cin) bf16
            aff_ref = param_refs[2 * li + 1]             # (Cout, 2)  f32: [scale, shift]
            c_in_l = h.shape[0]
            # Cast before slicing when channel count is packed-sublane aligned
            # (halves im2col copy traffic); values are identical either way.
            src = h.astype(jnp.bfloat16) if (c_in_l % 16 == 0) else h
            # im2col: K dilated time-shifts stacked along channels -> one fused matmul
            if k == 1:
                slab = src[:, :l_out]
            else:
                slab = jnp.concatenate(
                    [src[:, j * d:j * d + l_out] for j in range(k)], axis=0)
            slab = slab.astype(jnp.bfloat16)
            acc = jnp.dot(w_ref[...], slab,              # (Cout, l_out), f32 accumulate
                          preferred_element_type=jnp.float32)
            if has_bn_gelu:
                acc = acc * aff_ref[:, 0:1] + aff_ref[:, 1:2]  # conv bias + BN (folded)
                acc = _gelu(acc)                         # Dropout = identity (eval)
            else:
                acc = acc + aff_ref[:, 1:2]              # final 1x1 conv: bias only
            h = acc

        # residual: clean = orig + minus_noise  (single unmasked lane-dense store)
        out_ref[...] = xc_blk + h

    out_c = pl.pallas_call(
        kernel,
        out_shape=jax.ShapeDtypeStruct((B, cin, T), x.dtype),
        grid=(B,),
        in_specs=in_specs,
        out_specs=pl.BlockSpec((pl.Squeezed(), cin, T), lambda b: (b, 0, 0)),
        compiler_params=pltpu.CompilerParams(dimension_semantics=("parallel",)),
    )(*kernel_inputs)
    # back to the module's (B, T, C) output layout
    return jnp.transpose(out_c, (0, 2, 1))


# ---- pure-JAX reference (same math, via lax.conv, matching bf16 precision) --
def reference(x, params):
    p0 = _left_pad()
    h = jnp.transpose(x, (0, 2, 1))                      # (B, Cin, T) like torch
    h = jnp.concatenate([jnp.repeat(h[:, :, :1], p0, axis=2), h], axis=2)
    for p in params:
        y = jax.lax.conv_general_dilated(
            h.astype(jnp.bfloat16), p['w'].astype(jnp.bfloat16),
            window_strides=(1,), padding='VALID', rhs_dilation=(p['d'],),
            dimension_numbers=('NCH', 'OIH', 'NCH'),
            preferred_element_type=jnp.float32)
        y = y + p['b'][None, :, None]
        if p['gamma'] is not None:
            y = ((y - p['mean'][None, :, None])
                 * (p['gamma'][None, :, None]
                    / jnp.sqrt(p['var'][None, :, None] + BN_EPS))
                 + p['beta'][None, :, None])
            y = _gelu(y)
        h = y
    return x + jnp.transpose(h, (0, 2, 1))


if __name__ == "__main__":
    key = jax.random.PRNGKey(0)
    kx, kp = jax.random.split(key)
    B, T, IN_DIM = 2, 128, 8          # config['input_dim'] = 8, seq len 128
    x = jax.random.normal(kx, (B, T, IN_DIM), jnp.float32)
    params = init_params(kp, IN_DIM)

    out = imu_cnn_denoiser(x, params)
    out = jax.block_until_ready(out)

    ref = reference(x, params)
    np.testing.assert_allclose(np.asarray(out), np.asarray(ref),
                               rtol=1e-2, atol=1e-2)
    print("KERNEL_OK")
</pallas_src>

<mosaic_0001>
module attributes {stable_mosaic.version = 11 : i64} {
  func.func @kernel(%arg0: i32, %arg1: memref<1x8x128xf32, #tpu.memory_space<vmem>>, %arg2: memref<16x56xbf16, #tpu.memory_space<vmem>>, %arg3: memref<16x2xf32, #tpu.memory_space<vmem>>, %arg4: memref<32x112xbf16, #tpu.memory_space<vmem>>, %arg5: memref<32x2xf32, #tpu.memory_space<vmem>>, %arg6: memref<64x224xbf16, #tpu.memory_space<vmem>>, %arg7: memref<64x2xf32, #tpu.memory_space<vmem>>, %arg8: memref<128x448xbf16, #tpu.memory_space<vmem>>, %arg9: memref<128x2xf32, #tpu.memory_space<vmem>>, %arg10: memref<8x128xbf16, #tpu.memory_space<vmem>>, %arg11: memref<8x2xf32, #tpu.memory_space<vmem>>, %arg12: memref<1x8x128xf32, #tpu.memory_space<vmem>>) attributes {dimension_semantics = [#tpu.dimension_semantics<parallel>], iteration_bounds = array<i64: 2>, scalar_prefetch = 0 : i64, scratch_operands = 0 : i64, tpu.core_type = #tpu.core_type<tc>, window_params = [{transform_indices = @transform_0, window_bounds = array<i64: 1, 8, 128>}, {pipeline_mode = #tpu.pipeline_mode<synchronous>, transform_indices = @transform_1, window_bounds = array<i64: 16, 56>}, {pipeline_mode = #tpu.pipeline_mode<synchronous>, transform_indices = @transform_2, window_bounds = array<i64: 16, 2>}, {pipeline_mode = #tpu.pipeline_mode<synchronous>, transform_indices = @transform_3, window_bounds = array<i64: 32, 112>}, {pipeline_mode = #tpu.pipeline_mode<synchronous>, transform_indices = @transform_4, window_bounds = array<i64: 32, 2>}, {pipeline_mode = #tpu.pipeline_mode<synchronous>, transform_indices = @transform_5, window_bounds = array<i64: 64, 224>}, {pipeline_mode = #tpu.pipeline_mode<synchronous>, transform_indices = @transform_6, window_bounds = array<i64: 64, 2>}, {pipeline_mode = #tpu.pipeline_mode<synchronous>, transform_indices = @transform_7, window_bounds = array<i64: 128, 448>}, {pipeline_mode = #tpu.pipeline_mode<synchronous>, transform_indices = @transform_8, window_bounds = array<i64: 128, 2>}, {pipeline_mode = #tpu.pipeline_mode<synchronous>, transform_indices = @transform_9, window_bounds = array<i64: 8, 128>}, {pipeline_mode = #tpu.pipeline_mode<synchronous>, transform_indices = @transform_10, window_bounds = array<i64: 8, 2>}, {transform_indices = @transform_11, window_bounds = array<i64: 1, 8, 128>}]} {
    %c0 = arith.constant 0 : index
    %c0_0 = arith.constant 0 : index
    %c0_1 = arith.constant 0 : index
    %0 = vector.load %arg1[%c0, %c0_0, %c0_1] : memref<1x8x128xf32, #tpu.memory_space<vmem>>, vector<1x8x128xf32>
    %1 = vector.shape_cast %0 : vector<1x8x128xf32> to vector<8x128xf32>
    %2 = vector.extract_strided_slice %1 {offsets = [0, 0], sizes = [8, 1], strides = [1, 1]} : vector<8x128xf32> to vector<8x1xf32>
    %3 = vector.shape_cast %2 : vector<8x1xf32> to vector<8x1xf32>
    %4 = vector.broadcast %3 : vector<8x1xf32> to vector<8x510xf32>
    %5 = tpu.concatenate %4, %1 in 1 : vector<8x510xf32>, vector<8x128xf32> -> vector<8x638xf32>
    %6 = vector.extract_strided_slice %5 {offsets = [0, 0], sizes = [8, 632], strides = [1, 1]} : vector<8x638xf32> to vector<8x632xf32>
    %7 = vector.extract_strided_slice %5 {offsets = [0, 1], sizes = [8, 632], strides = [1, 1]} : vector<8x638xf32> to vector<8x632xf32>
    %8 = vector.extract_strided_slice %5 {offsets = [0, 2], sizes = [8, 632], strides = [1, 1]} : vector<8x638xf32> to vector<8x632xf32>
    %9 = vector.extract_strided_slice %5 {offsets = [0, 3], sizes = [8, 632], strides = [1, 1]} : vector<8x638xf32> to vector<8x632xf32>
    %10 = vector.extract_strided_slice %5 {offsets = [0, 4], sizes = [8, 632], strides = [1, 1]} : vector<8x638xf32> to vector<8x632xf32>
    %11 = vector.extract_strided_slice %5 {offsets = [0, 5], sizes = [8, 632], strides = [1, 1]} : vector<8x638xf32> to vector<8x632xf32>
    %12 = vector.extract_strided_slice %5 {offsets = [0, 6], sizes = [8, 632], strides = [1, 1]} : vector<8x638xf32> to vector<8x632xf32>
    %13 = tpu.concatenate %6, %7, %8, %9, %10, %11, %12 in 0 : vector<8x632xf32>, vector<8x632xf32>, vector<8x632xf32>, vector<8x632xf32>, vector<8x632xf32>, vector<8x632xf32>, vector<8x632xf32> -> vector<56x632xf32>
    %14 = arith.truncf %13 : vector<56x632xf32> to vector<56x632xbf16>
    %c0_2 = arith.constant 0 : index
    %c0_3 = arith.constant 0 : index
    %15 = vector.load %arg2[%c0_2, %c0_3] : memref<16x56xbf16, #tpu.memory_space<vmem>>, vector<16x56xbf16>
    %cst = arith.constant dense<0.000000e+00> : vector<16x632xf32>
    %16 = tpu.matmul %15, %14, %cst {dimension_numbers = #tpu.dot_dimension_numbers<[1], [0], [0], [1], [0, 0, 1, 1], [], []>} : vector<16x56xbf16>, vector<56x632xbf16>, vector<16x632xf32> -> vector<16x632xf32>
    %c0_4 = arith.constant 0 : index
    %c0_5 = arith.constant 0 : index
    %17 = vector.load %arg3[%c0_4, %c0_5] : memref<16x2xf32, #tpu.memory_space<vmem>>, vector<16x1xf32>
    %18 = vector.broadcast %17 : vector<16x1xf32> to vector<16x632xf32>
    %19 = arith.mulf %16, %18 : vector<16x632xf32>
    %c0_6 = arith.constant 0 : index
    %c1 = arith.constant 1 : index
    %20 = vector.load %arg3[%c0_6, %c1] : memref<16x2xf32, #tpu.memory_space<vmem>>, vector<16x1xf32>
    %21 = vector.broadcast %20 : vector<16x1xf32> to vector<16x632xf32>
    %22 = arith.addf %19, %21 : vector<16x632xf32>
    %cst_7 = arith.constant 5.000000e-01 : f32
    %23 = vector.broadcast %cst_7 : f32 to vector<16x632xf32>
    %24 = arith.mulf %23, %22 : vector<16x632xf32>
    %cst_8 = arith.constant 0.707106769 : f32
    %25 = vector.broadcast %cst_8 : f32 to vector<16x632xf32>
    %26 = arith.mulf %22, %25 : vector<16x632xf32>
    %27 = math.erf %26 : vector<16x632xf32>
    %cst_9 = arith.constant 1.000000e+00 : f32
    %28 = vector.broadcast %cst_9 : f32 to vector<16x632xf32>
    %29 = arith.addf %28, %27 : vector<16x632xf32>
    %30 = arith.mulf %24, %29 : vector<16x632xf32>
    %31 = arith.truncf %30 : vector<16x632xf32> to vector<16x632xbf16>
    %32 = vector.extract_strided_slice %31 {offsets = [0, 0], sizes = [16, 608], strides = [1, 1]} : vector<16x632xbf16> to vector<16x608xbf16>
    %33 = vector.extract_strided_slice %31 {offsets = [0, 4], sizes = [16, 608], strides = [1, 1]} : vector<16x632xbf16> to vector<16x608xbf16>
    %34 = vector.extract_strided_slice %31 {offsets = [0, 8], sizes = [16, 608], strides = [1, 1]} : vector<16x632xbf16> to vector<16x608xbf16>
    %35 = vector.extract_strided_slice %31 {offsets = [0, 12], sizes = [16, 608], strides = [1, 1]} : vector<16x632xbf16> to vector<16x608xbf16>
    %36 = vector.extract_strided_slice %31 {offsets = [0, 16], sizes = [16, 608], strides = [1, 1]} : vector<16x632xbf16> to vector<16x608xbf16>
    %37 = vector.extract_strided_slice %31 {offsets = [0, 20], sizes = [16, 608], strides = [1, 1]} : vector<16x632xbf16> to vector<16x608xbf16>
    %38 = vector.extract_strided_slice %31 {offsets = [0, 24], sizes = [16, 608], strides = [1, 1]} : vector<16x632xbf16> to vector<16x608xbf16>
    %39 = tpu.concatenate %32, %33, %34, %35, %36, %37, %38 in 0 : vector<16x608xbf16>, vector<16x608xbf16>, vector<16x608xbf16>, vector<16x608xbf16>, vector<16x608xbf16>, vector<16x608xbf16>, vector<16x608xbf16> -> vector<112x608xbf16>
    %c0_10 = arith.constant 0 : index
    %c0_11 = arith.constant 0 : index
    %40 = vector.load %arg4[%c0_10, %c0_11] : memref<32x112xbf16, #tpu.memory_space<vmem>>, vector<32x112xbf16>
    %cst_12 = arith.constant dense<0.000000e+00> : vector<32x608xf32>
    %41 = tpu.matmul %40, %39, %cst_12 {dimension_numbers = #tpu.dot_dimension_numbers<[1], [0], [0], [1], [0, 0, 1, 1], [], []>} : vector<32x112xbf16>, vector<112x608xbf16>, vector<32x608xf32> -> vector<32x608xf32>
    %c0_13 = arith.constant 0 : index
    %c0_14 = arith.constant 0 : index
    %42 = vector.load %arg5[%c0_13, %c0_14] : memref<32x2xf32, #tpu.memory_space<vmem>>, vector<32x1xf32>
    %43 = vector.broadcast %42 : vector<32x1xf32> to vector<32x608xf32>
    %44 = arith.mulf %41, %43 : vector<32x608xf32>
    %c0_15 = arith.constant 0 : index
    %c1_16 = arith.constant 1 : index
    %45 = vector.load %arg5[%c0_15, %c1_16] : memref<32x2xf32, #tpu.memory_space<vmem>>, vector<32x1xf32>
    %46 = vector.broadcast %45 : vector<32x1xf32> to vector<32x608xf32>
    %47 = arith.addf %44, %46 : vector<32x608xf32>
    %cst_17 = arith.constant 5.000000e-01 : f32
    %48 = vector.broadcast %cst_17 : f32 to vector<32x608xf32>
    %49 = arith.mulf %48, %47 : vector<32x608xf32>
    %cst_18 = arith.constant 0.707106769 : f32
    %50 = vector.broadcast %cst_18 : f32 to vector<32x608xf32>
    %51 = arith.mulf %47, %50 : vector<32x608xf32>
    %52 = math.erf %51 : vector<32x608xf32>
    %cst_19 = arith.constant 1.000000e+00 : f32
    %53 = vector.broadcast %cst_19 : f32 to vector<32x608xf32>
    %54 = arith.addf %53, %52 : vector<32x608xf32>
    %55 = arith.mulf %49, %54 : vector<32x608xf32>
    %56 = arith.truncf %55 : vector<32x608xf32> to vector<32x608xbf16>
    %57 = vector.extract_strided_slice %56 {offsets = [0, 0], sizes = [32, 512], strides = [1, 1]} : vector<32x608xbf16> to vector<32x512xbf16>
    %58 = vector.extract_strided_slice %56 {offsets = [0, 16], sizes = [32, 512], strides = [1, 1]} : vector<32x608xbf16> to vector<32x512xbf16>
    %59 = vector.extract_strided_slice %56 {offsets = [0, 32], sizes = [32, 512], strides = [1, 1]} : vector<32x608xbf16> to vector<32x512xbf16>
    %60 = vector.extract_strided_slice %56 {offsets = [0, 48], sizes = [32, 512], strides = [1, 1]} : vector<32x608xbf16> to vector<32x512xbf16>
    %61 = vector.extract_strided_slice %56 {offsets = [0, 64], sizes = [32, 512], strides = [1, 1]} : vector<32x608xbf16> to vector<32x512xbf16>
    %62 = vector.extract_strided_slice %56 {offsets = [0, 80], sizes = [32, 512], strides = [1, 1]} : vector<32x608xbf16> to vector<32x512xbf16>
    %63 = vector.extract_strided_slice %56 {offsets = [0, 96], sizes = [32, 512], strides = [1, 1]} : vector<32x608xbf16> to vector<32x512xbf16>
    %64 = tpu.concatenate %57, %58, %59, %60, %61, %62, %63 in 0 : vector<32x512xbf16>, vector<32x512xbf16>, vector<32x512xbf16>, vector<32x512xbf16>, vector<32x512xbf16>, vector<32x512xbf16>, vector<32x512xbf16> -> vector<224x512xbf16>
    %c0_20 = arith.constant 0 : index
    %c0_21 = arith.constant 0 : index
    %65 = vector.load %arg6[%c0_20, %c0_21] : memref<64x224xbf16, #tpu.memory_space<vmem>>, vector<64x224xbf16>
    %cst_22 = arith.constant dense<0.000000e+00> : vector<64x512xf32>
    %66 = tpu.matmul %65, %64, %cst_22 {dimension_numbers = #tpu.dot_dimension_numbers<[1], [0], [0], [1], [0, 0, 1, 1], [], []>} : vector<64x224xbf16>, vector<224x512xbf16>, vector<64x512xf32> -> vector<64x512xf32>
    %c0_23 = arith.constant 0 : index
    %c0_24 = arith.constant 0 : index
    %67 = vector.load %arg7[%c0_23, %c0_24] : memref<64x2xf32, #tpu.memory_space<vmem>>, vector<64x1xf32>
    %68 = vector.broadcast %67 : vector<64x1xf32> to vector<64x512xf32>
    %69 = arith.mulf %66, %68 : vector<64x512xf32>
    %c0_25 = arith.constant 0 : index
    %c1_26 = arith.constant 1 : index
    %70 = vector.load %arg7[%c0_25, %c1_26] : memref<64x2xf32, #tpu.memory_space<vmem>>, vector<64x1xf32>
    %71 = vector.broadcast %70 : vector<64x1xf32> to vector<64x512xf32>
    %72 = arith.addf %69, %71 : vector<64x512xf32>
    %cst_27 = arith.constant 5.000000e-01 : f32
    %73 = vector.broadcast %cst_27 : f32 to vector<64x512xf32>
    %74 = arith.mulf %73, %72 : vector<64x512xf32>
    %cst_28 = arith.constant 0.707106769 : f32
    %75 = vector.broadcast %cst_28 : f32 to vector<64x512xf32>
    %76 = arith.mulf %72, %75 : vector<64x512xf32>
    %77 = math.erf %76 : vector<64x512xf32>
    %cst_29 = arith.constant 1.000000e+00 : f32
    %78 = vector.broadcast %cst_29 : f32 to vector<64x512xf32>
    %79 = arith.addf %78, %77 : vector<64x512xf32>
    %80 = arith.mulf %74, %79 : vector<64x512xf32>
    %81 = arith.truncf %80 : vector<64x512xf32> to vector<64x512xbf16>
    %82 = vector.extract_strided_slice %81 {offsets = [0, 0], sizes = [64, 128], strides = [1, 1]} : vector<64x512xbf16> to vector<64x128xbf16>
    %83 = vector.extract_strided_slice %81 {offsets = [0, 64], sizes = [64, 128], strides = [1, 1]} : vector<64x512xbf16> to vector<64x128xbf16>
    %84 = vector.extract_strided_slice %81 {offsets = [0, 128], sizes = [64, 128], strides = [1, 1]} : vector<64x512xbf16> to vector<64x128xbf16>
    %85 = vector.extract_strided_slice %81 {offsets = [0, 192], sizes = [64, 128], strides = [1, 1]} : vector<64x512xbf16> to vector<64x128xbf16>
    %86 = vector.extract_strided_slice %81 {offsets = [0, 256], sizes = [64, 128], strides = [1, 1]} : vector<64x512xbf16> to vector<64x128xbf16>
    %87 = vector.extract_strided_slice %81 {offsets = [0, 320], sizes = [64, 128], strides = [1, 1]} : vector<64x512xbf16> to vector<64x128xbf16>
    %88 = vector.extract_strided_slice %81 {offsets = [0, 384], sizes = [64, 128], strides = [1, 1]} : vector<64x512xbf16> to vector<64x128xbf16>
    %89 = tpu.concatenate %82, %83, %84, %85, %86, %87, %88 in 0 : vector<64x128xbf16>, vector<64x128xbf16>, vector<64x128xbf16>, vector<64x128xbf16>, vector<64x128xbf16>, vector<64x128xbf16>, vector<64x128xbf16> -> vector<448x128xbf16>
    %c0_30 = arith.constant 0 : index
    %c0_31 = arith.constant 0 : index
    %90 = vector.load %arg8[%c0_30, %c0_31] : memref<128x448xbf16, #tpu.memory_space<vmem>>, vector<128x448xbf16>
    %cst_32 = arith.constant dense<0.000000e+00> : vector<128x128xf32>
    %91 = tpu.matmul %90, %89, %cst_32 {dimension_numbers = #tpu.dot_dimension_numbers<[1], [0], [0], [1], [0, 0, 1, 1], [], []>} : vector<128x448xbf16>, vector<448x128xbf16>, vector<128x128xf32> -> vector<128x128xf32>
    %c0_33 = arith.constant 0 : index
    %c0_34 = arith.constant 0 : index
    %92 = vector.load %arg9[%c0_33, %c0_34] : memref<128x2xf32, #tpu.memory_space<vmem>>, vector<128x1xf32>
    %93 = vector.broadcast %92 : vector<128x1xf32> to vector<128x128xf32>
    %94 = arith.mulf %91, %93 : vector<128x128xf32>
    %c0_35 = arith.constant 0 : index
    %c1_36 = arith.constant 1 : index
    %95 = vector.load %arg9[%c0_35, %c1_36] : memref<128x2xf32, #tpu.memory_space<vmem>>, vector<128x1xf32>
    %96 = vector.broadcast %95 : vector<128x1xf32> to vector<128x128xf32>
    %97 = arith.addf %94, %96 : vector<128x128xf32>
    %cst_37 = arith.constant 5.000000e-01 : f32
    %98 = vector.broadcast %cst_37 : f32 to vector<128x128xf32>
    %99 = arith.mulf %98, %97 : vector<128x128xf32>
    %cst_38 = arith.constant 0.707106769 : f32
    %100 = vector.broadcast %cst_38 : f32 to vector<128x128xf32>
    %101 = arith.mulf %97, %100 : vector<128x128xf32>
    %102 = math.erf %101 : vector<128x128xf32>
    %cst_39 = arith.constant 1.000000e+00 : f32
    %103 = vector.broadcast %cst_39 : f32 to vector<128x128xf32>
    %104 = arith.addf %103, %102 : vector<128x128xf32>
    %105 = arith.mulf %99, %104 : vector<128x128xf32>
    %106 = arith.truncf %105 : vector<128x128xf32> to vector<128x128xbf16>
    %c0_40 = arith.constant 0 : index
    %c0_41 = arith.constant 0 : index
    %107 = vector.load %arg10[%c0_40, %c0_41] : memref<8x128xbf16, #tpu.memory_space<vmem>>, vector<8x128xbf16>
    %cst_42 = arith.constant dense<0.000000e+00> : vector<8x128xf32>
    %108 = tpu.matmul %107, %106, %cst_42 {dimension_numbers = #tpu.dot_dimension_numbers<[1], [0], [0], [1], [0, 0, 1, 1], [], []>} : vector<8x128xbf16>, vector<128x128xbf16>, vector<8x128xf32> -> vector<8x128xf32>
    %c0_43 = arith.constant 0 : index
    %c1_44 = arith.constant 1 : index
    %109 = vector.load %arg11[%c0_43, %c1_44] : memref<8x2xf32, #tpu.memory_space<vmem>>, vector<8x1xf32>
    %110 = vector.broadcast %109 : vector<8x1xf32> to vector<8x128xf32>
    %111 = arith.addf %108, %110 : vector<8x128xf32>
    %112 = arith.addf %1, %111 : vector<8x128xf32>
    %c0_45 = arith.constant 0 : index
    %c0_46 = arith.constant 0 : index
    %c0_47 = arith.constant 0 : index
    %113 = vector.load %arg12[%c0_45, %c0_46, %c0_47] : memref<1x8x128xf32, #tpu.memory_space<vmem>>, vector<1x8x128xf32>
    %114 = vector.shape_cast %113 : vector<1x8x128xf32> to vector<8x128xf32>
    %115 = vector.shape_cast %112 : vector<8x128xf32> to vector<1x8x128xf32>
    tpu.vector_store %arg12[%c0_45, %c0_46, %c0_47], %115 {strides = array<i32>} : memref<1x8x128xf32, #tpu.memory_space<vmem>>, vector<1x8x128xf32>,
    return
  }
  func.func @transform_0(%arg0: i32) -> (i32, i32, i32) {
    %c0_i32 = arith.constant 0 : i32
    %c0_i32_0 = arith.constant 0 : i32
    %c0_i32_1 = arith.constant 0 : i32
    return %arg0, %c0_i32, %c0_i32_0 : i32, i32, i32
  }
  func.func @transform_1(%arg0: i32) -> (i32, i32) {
    %c0_i32 = arith.constant 0 : i32
    %c0_i32_0 = arith.constant 0 : i32
    %c0_i32_1 = arith.constant 0 : i32
    return %c0_i32, %c0_i32_0 : i32, i32
  }
  func.func @transform_2(%arg0: i32) -> (i32, i32) {
    %c0_i32 = arith.constant 0 : i32
    %c0_i32_0 = arith.constant 0 : i32
    %c0_i32_1 = arith.constant 0 : i32
    return %c0_i32, %c0_i32_0 : i32, i32
  }
  func.func @transform_3(%arg0: i32) -> (i32, i32) {
    %c0_i32 = arith.constant 0 : i32
    %c0_i32_0 = arith.constant 0 : i32
    %c0_i32_1 = arith.constant 0 : i32
    return %c0_i32, %c0_i32_0 : i32, i32
  }
  func.func @transform_4(%arg0: i32) -> (i32, i32) {
    %c0_i32 = arith.constant 0 : i32
    %c0_i32_0 = arith.constant 0 : i32
    %c0_i32_1 = arith.constant 0 : i32
    return %c0_i32, %c0_i32_0 : i32, i32
  }
  func.func @transform_5(%arg0: i32) -> (i32, i32) {
    %c0_i32 = arith.constant 0 : i32
    %c0_i32_0 = arith.constant 0 : i32
    %c0_i32_1 = arith.constant 0 : i32
    return %c0_i32, %c0_i32_0 : i32, i32
  }
  func.func @transform_6(%arg0: i32) -> (i32, i32) {
    %c0_i32 = arith.constant 0 : i32
    %c0_i32_0 = arith.constant 0 : i32
    %c0_i32_1 = arith.constant 0 : i32
    return %c0_i32, %c0_i32_0 : i32, i32
  }
  func.func @transform_7(%arg0: i32) -> (i32, i32) {
    %c0_i32 = arith.constant 0 : i32
    %c0_i32_0 = arith.constant 0 : i32
    %c0_i32_1 = arith.constant 0 : i32
    return %c0_i32, %c0_i32_0 : i32, i32
  }
  func.func @transform_8(%arg0: i32) -> (i32, i32) {
    %c0_i32 = arith.constant 0 : i32
    %c0_i32_0 = arith.constant 0 : i32
    %c0_i32_1 = arith.constant 0 : i32
    return %c0_i32, %c0_i32_0 : i32, i32
  }
  func.func @transform_9(%arg0: i32) -> (i32, i32) {
    %c0_i32 = arith.constant 0 : i32
    %c0_i32_0 = arith.constant 0 : i32
    %c0_i32_1 = arith.constant 0 : i32
    return %c0_i32, %c0_i32_0 : i32, i32
  }
  func.func @transform_10(%arg0: i32) -> (i32, i32) {
    %c0_i32 = arith.constant 0 : i32
    %c0_i32_0 = arith.constant 0 : i32
    %c0_i32_1 = arith.constant 0 : i32
    return %c0_i32, %c0_i32_0 : i32, i32
  }
  func.func @transform_11(%arg0: i32) -> (i32, i32, i32) {
    %c0_i32 = arith.constant 0 : i32
    %c0_i32_0 = arith.constant 0 : i32
    %c0_i32_1 = arith.constant 0 : i32
    return %arg0, %c0_i32, %c0_i32_0 : i32, i32, i32
  }
}

</mosaic_0001>

<llo_original>
// kernel: tpu_custom_call.1
$region0: #{tpu_custom_call.1}
  #allocation0 [shape = 'u32[]', space=smem, size = 0x4, offset = 0x4, fixed_abs, tag = 'smem constant byte address 0x4 - core index']
  #allocation1 [shape = 'u32[144,128]{1,0:T(1,128)}', space=vmem, size = 0x12000, scoped, tag = 'internal scratch']
  %s0 = inlined_call_operand.vmem [shape: f32[2,8,128], index: 0, kind: input, shape index: {}]
  %s1 = inlined_call_operand.vmem [shape: bf16[16,56], index: 1, kind: input, shape index: {}]
  %s2 = inlined_call_operand.vmem [shape: f32[16,2], index: 2, kind: input, shape index: {}]
  %s3 = inlined_call_operand.vmem [shape: bf16[32,112], index: 3, kind: input, shape index: {}]
  %s4 = inlined_call_operand.vmem [shape: f32[32,2], index: 4, kind: input, shape index: {}]
  %s5 = inlined_call_operand.vmem [shape: bf16[64,224], index: 5, kind: input, shape index: {}]
  %s6 = inlined_call_operand.vmem [shape: f32[64,2], index: 6, kind: input, shape index: {}]
  %s7 = inlined_call_operand.vmem [shape: bf16[128,448], index: 7, kind: input, shape index: {}]
  %s8 = inlined_call_operand.vmem [shape: f32[128,2], index: 8, kind: input, shape index: {}]
  %s9 = inlined_call_operand.vmem [shape: bf16[8,128], index: 9, kind: input, shape index: {}]
  %s10 = inlined_call_operand.vmem [shape: f32[8,2], index: 10, kind: input, shape index: {}]
  %s11 = inlined_call_operand.hbm [shape: f32[2,8,128], index: 11, kind: output, shape index: {}]
  %s12 = sld [smem:[#allocation0]]
  $region77: #{tpu_custom_call.1} parent=0
    _
  %s14 = ssub.s32 1, %s12
  %s15 = scalar_select 0, %s14, %s12
  $region1: #{tpu_custom_call.1} parent=0
    #allocation2 [shape = 'u8[8192]{0}', space=vmem, size = 0x2000, scoped, tag = 'output window, operand 0']
    #allocation3 [shape = 's32[2]{0}', space=sflag, size = 0x8, scoped, tag = 'scoped memory for tpu_custom_call.1']
    %16 = vsyncpa [#allocation3], 0
    %s17 = scalar_lea.sflag [#allocation3], 1
    %18 = vsyncpa %s17, 0
    loop: start=0, step=1, limit=4
    $region2: #{tpu_custom_call.1} parent=1 // loop_pre_header
      _
    $region3: #{tpu_custom_call.1} parent=1 // loop_header
      %s20 = sphi 0, %s24
      %p21 = scmp.ge.s32.totalorder %s20, 4
      %s30 = sphi 0, %s32
      %s33 = sphi 0, %s30
      %s34 = sphi 0, %s33
      %s50 = sphi 0, %s34
      %s54 = sphi 0, %s54
      %s56 = sphi 0, %s54
      %s57 = sphi 0, %s56
      %s71 = sphi 0, %s57
      %s75 = sphi 0, %s75
      %s77 = sphi 0, %s75
      %s78 = sphi 0, %s77
      %s92 = sphi 0, %s78
      %s96 = sphi 0, %s96
      %s98 = sphi 0, %s96
      %s99 = sphi 0, %s98
      %s113 = sphi 0, %s99
      %s117 = sphi 0, %s117
      %s119 = sphi 0, %s117
      %s120 = sphi 0, %s119
      %s134 = sphi 0, %s120
      %s138 = sphi 0, %s138
      %s140 = sphi 0, %s138
      %s141 = sphi 0, %s140
      %s155 = sphi 0, %s141
      %s159 = sphi 0, %s159
      %s161 = sphi 0, %s159
      %s162 = sphi 0, %s161
      %s176 = sphi 0, %s162
      %s180 = sphi 0, %s180
      %s182 = sphi 0, %s180
      %s183 = sphi 0, %s182
      %s197 = sphi 0, %s183
      %s201 = sphi 0, %s201
      %s203 = sphi 0, %s201
      %s204 = sphi 0, %s203
      %s218 = sphi 0, %s204
      %s222 = sphi 0, %s222
      %s224 = sphi 0, %s222
      %s225 = sphi 0, %s224
      %s239 = sphi 0, %s225
      %s243 = sphi 0, %s243
      %s245 = sphi 0, %s243
      %s246 = sphi 0, %s245
      %s260 = sphi 0, %s246
      %s266 = sphi 0, %s268
      %s269 = sphi 0, %s266
      %s270 = sphi 0, %s269
      %s286 = sphi 0, %s270
    $region4: #{tpu_custom_call.1} parent=1 // loop_header_branch
      %23 = sbr.rel (%p21) target = $region8
    $region5: #{tpu_custom_call.1} parent=1 // loop_body
      %s25 = ssub.s32 %s20, 1
      %s26 = ssub.s32 %s20, 2
      %s27 = sadd.s32 %s20, 1
      %s28 = ssub.s32 %s20, %s27
      %p29 = scmp.eq.s32.totalorder %s28, 0
      %s31 = sadd.s32 %s30, 1
      %s32 = scalar_select %p29, %s30, %s31
      %p35 = pneg %p29
      %p36 = scmp.eq.s32.totalorder %s20, 1
      %p37 = por %p35, %p36
      %p38 = scmp.ne.s32.totalorder %s30, %s33
      %p39 = scmp.eq.s32.totalorder %s20, 0
      %p40 = por %p38, %p39
      %p41 = scmp.ne.s32.totalorder %s30, %s33
      %p42 = scmp.eq.s32.totalorder %s25, 1
      %p43 = por %p41, %p42
      %p44 = scmp.ne.s32.totalorder %s33, %s34
      %p45 = scmp.eq.s32.totalorder %s25, 0
      %p46 = por %p44, %p45
      %p47 = scmp.ne.s32.totalorder %s33, %s34
      %p48 = scmp.eq.s32.totalorder %s26, 1
      %p49 = por %p47, %p48
      %p51 = scmp.ne.s32.totalorder %s34, %s50
      %p52 = scmp.eq.s32.totalorder %s26, 0
      %p53 = por %p51, %p52
      %s55 = sadd.s32 %s54, 1
      %p58 = scmp.eq.s32.totalorder %s20, 1
      %p59 = scmp.ne.s32.totalorder %s54, %s56
      %p60 = scmp.eq.s32.totalorder %s20, 0
      %p61 = por %p59, %p60
      %p62 = scmp.ne.s32.totalorder %s54, %s56
      %p63 = scmp.eq.s32.totalorder %s25, 1
      %p64 = por %p62, %p63
      %p65 = scmp.ne.s32.totalorder %s56, %s57
      %p66 = scmp.eq.s32.totalorder %s25, 0
      %p67 = por %p65, %p66
      %p68 = scmp.ne.s32.totalorder %s56, %s57
      %p69 = scmp.eq.s32.totalorder %s26, 1
      %p70 = por %p68, %p69
      %p72 = scmp.ne.s32.totalorder %s57, %s71
      %p73 = scmp.eq.s32.totalorder %s26, 0
      %p74 = por %p72, %p73
      %s76 = sadd.s32 %s75, 1
      %p79 = scmp.eq.s32.totalorder %s20, 1
      %p80 = scmp.ne.s32.totalorder %s75, %s77
      %p81 = scmp.eq.s32.totalorder %s20, 0
      %p82 = por %p80, %p81
      %p83 = scmp.ne.s32.totalorder %s75, %s77
      %p84 = scmp.eq.s32.totalorder %s25, 1
      %p85 = por %p83, %p84
      %p86 = scmp.ne.s32.totalorder %s77, %s78
      %p87 = scmp.eq.s32.totalorder %s25, 0
      %p88 = por %p86, %p87
      %p89 = scmp.ne.s32.totalorder %s77, %s78
      %p90 = scmp.eq.s32.totalorder %s26, 1
      %p91 = por %p89, %p90
      %p93 = scmp.ne.s32.totalorder %s78, %s92
      %p94 = scmp.eq.s32.totalorder %s26, 0
      %p95 = por %p93, %p94
      %s97 = sadd.s32 %s96, 1
      %p100 = scmp.eq.s32.totalorder %s20, 1
      %p101 = scmp.ne.s32.totalorder %s96, %s98
      %p102 = scmp.eq.s32.totalorder %s20, 0
      %p103 = por %p101, %p102
      %p104 = scmp.ne.s32.totalorder %s96, %s98
      %p105 = scmp.eq.s32.totalorder %s25, 1
      %p106 = por %p104, %p105
      %p107 = scmp.ne.s32.totalorder %s98, %s99
      %p108 = scmp.eq.s32.totalorder %s25, 0
      %p109 = por %p107, %p108
      %p110 = scmp.ne.s32.totalorder %s98, %s99
      %p111 = scmp.eq.s32.totalorder %s26, 1
      %p112 = por %p110, %p111
      %p114 = scmp.ne.s32.totalorder %s99, %s113
      %p115 = scmp.eq.s32.totalorder %s26, 0
      %p116 = por %p114, %p115
      %s118 = sadd.s32 %s117, 1
      %p121 = scmp.eq.s32.totalorder %s20, 1
      %p122 = scmp.ne.s32.totalorder %s117, %s119
      %p123 = scmp.eq.s32.totalorder %s20, 0
      %p124 = por %p122, %p123
      %p125 = scmp.ne.s32.totalorder %s117, %s119
      %p126 = scmp.eq.s32.totalorder %s25, 1
      %p127 = por %p125, %p126
      %p128 = scmp.ne.s32.totalorder %s119, %s120
      %p129 = scmp.eq.s32.totalorder %s25, 0
      %p130 = por %p128, %p129
      %p131 = scmp.ne.s32.totalorder %s119, %s120
      %p132 = scmp.eq.s32.totalorder %s26, 1
      %p133 = por %p131, %p132
      %p135 = scmp.ne.s32.totalorder %s120, %s134
      %p136 = scmp.eq.s32.totalorder %s26, 0
      %p137 = por %p135, %p136
      %s139 = sadd.s32 %s138, 1
      %p142 = scmp.eq.s32.totalorder %s20, 1
      %p143 = scmp.ne.s32.totalorder %s138, %s140
      %p144 = scmp.eq.s32.totalorder %s20, 0
      %p145 = por %p143, %p144
      %p146 = scmp.ne.s32.totalorder %s138, %s140
      %p147 = scmp.eq.s32.totalorder %s25, 1
      %p148 = por %p146, %p147
      %p149 = scmp.ne.s32.totalorder %s140, %s141
      %p150 = scmp.eq.s32.totalorder %s25, 0
      %p151 = por %p149, %p150
      %p152 = scmp.ne.s32.totalorder %s140, %s141
      %p153 = scmp.eq.s32.totalorder %s26, 1
      %p154 = por %p152, %p153
      %p156 = scmp.ne.s32.totalorder %s141, %s155
      %p157 = scmp.eq.s32.totalorder %s26, 0
      %p158 = por %p156, %p157
      %s160 = sadd.s32 %s159, 1
      %p163 = scmp.eq.s32.totalorder %s20, 1
      %p164 = scmp.ne.s32.totalorder %s159, %s161
      %p165 = scmp.eq.s32.totalorder %s20, 0
      %p166 = por %p164, %p165
      %p167 = scmp.ne.s32.totalorder %s159, %s161
      %p168 = scmp.eq.s32.totalorder %s25, 1
      %p169 = por %p167, %p168
      %p170 = scmp.ne.s32.totalorder %s161, %s162
      %p171 = scmp.eq.s32.totalorder %s25, 0
      %p172 = por %p170, %p171
      %p173 = scmp.ne.s32.totalorder %s161, %s162
      %p174 = scmp.eq.s32.totalorder %s26, 1
      %p175 = por %p173, %p174
      %p177 = scmp.ne.s32.totalorder %s162, %s176
      %p178 = scmp.eq.s32.totalorder %s26, 0
      %p179 = por %p177, %p178
      %s181 = sadd.s32 %s180, 1
      %p184 = scmp.eq.s32.totalorder %s20, 1
      %p185 = scmp.ne.s32.totalorder %s180, %s182
      %p186 = scmp.eq.s32.totalorder %s20, 0
      %p187 = por %p185, %p186
      %p188 = scmp.ne.s32.totalorder %s180, %s182
      %p189 = scmp.eq.s32.totalorder %s25, 1
      %p190 = por %p188, %p189
      %p191 = scmp.ne.s32.totalorder %s182, %s183
      %p192 = scmp.eq.s32.totalorder %s25, 0
      %p193 = por %p191, %p192
      %p194 = scmp.ne.s32.totalorder %s182, %s183
      %p195 = scmp.eq.s32.totalorder %s26, 1
      %p196 = por %p194, %p195
      %p198 = scmp.ne.s32.totalorder %s183, %s197
      %p199 = scmp.eq.s32.totalorder %s26, 0
      %p200 = por %p198, %p199
      %s202 = sadd.s32 %s201, 1
      %p205 = scmp.eq.s32.totalorder %s20, 1
      %p206 = scmp.ne.s32.totalorder %s201, %s203
      %p207 = scmp.eq.s32.totalorder %s20, 0
      %p208 = por %p206, %p207
      %p209 = scmp.ne.s32.totalorder %s201, %s203
      %p210 = scmp.eq.s32.totalorder %s25, 1
      %p211 = por %p209, %p210
      %p212 = scmp.ne.s32.totalorder %s203, %s204
      %p213 = scmp.eq.s32.totalorder %s25, 0
      %p214 = por %p212, %p213
      %p215 = scmp.ne.s32.totalorder %s203, %s204
      %p216 = scmp.eq.s32.totalorder %s26, 1
      %p217 = por %p215, %p216
      %p219 = scmp.ne.s32.totalorder %s204, %s218
      %p220 = scmp.eq.s32.totalorder %s26, 0
      %p221 = por %p219, %p220
      %s223 = sadd.s32 %s222, 1
      %p226 = scmp.eq.s32.totalorder %s20, 1
      %p227 = scmp.ne.s32.totalorder %s222, %s224
      %p228 = scmp.eq.s32.totalorder %s20, 0
      %p229 = por %p227, %p228
      %p230 = scmp.ne.s32.totalorder %s222, %s224
      %p231 = scmp.eq.s32.totalorder %s25, 1
      %p232 = por %p230, %p231
      %p233 = scmp.ne.s32.totalorder %s224, %s225
      %p234 = scmp.eq.s32.totalorder %s25, 0
      %p235 = por %p233, %p234
      %p236 = scmp.ne.s32.totalorder %s224, %s225
      %p237 = scmp.eq.s32.totalorder %s26, 1
      %p238 = por %p236, %p237
      %p240 = scmp.ne.s32.totalorder %s225, %s239
      %p241 = scmp.eq.s32.totalorder %s26, 0
      %p242 = por %p240, %p241
      %s244 = sadd.s32 %s243, 1
      %p247 = scmp.eq.s32.totalorder %s20, 1
      %p248 = scmp.ne.s32.totalorder %s243, %s245
      %p249 = scmp.eq.s32.totalorder %s20, 0
      %p250 = por %p248, %p249
      %p251 = scmp.ne.s32.totalorder %s243, %s245
      %p252 = scmp.eq.s32.totalorder %s25, 1
      %p253 = por %p251, %p252
      %p254 = scmp.ne.s32.totalorder %s245, %s246
      %p255 = scmp.eq.s32.totalorder %s25, 0
      %p256 = por %p254, %p255
      %p257 = scmp.ne.s32.totalorder %s245, %s246
      %p258 = scmp.eq.s32.totalorder %s26, 1
      %p259 = por %p257, %p258
      %p261 = scmp.ne.s32.totalorder %s246, %s260
      %p262 = scmp.eq.s32.totalorder %s26, 0
      %p263 = por %p261, %p262
      %s264 = ssub.s32 %s20, %s27
      %p265 = scmp.eq.s32.totalorder %s264, 0
      %s267 = sadd.s32 %s266, 1
      %s268 = scalar_select %p265, %s266, %s267
      %p271 = pneg %p265
      %p272 = scmp.eq.s32.totalorder %s20, 1
      %p273 = por %p271, %p272
      %p274 = scmp.ne.s32.totalorder %s266, %s269
      %p275 = scmp.eq.s32.totalorder %s20, 0
      %p276 = por %p274, %p275
      %p277 = scmp.ne.s32.totalorder %s266, %s269
      %p278 = scmp.eq.s32.totalorder %s25, 1
      %p279 = por %p277, %p278
      %p280 = scmp.ne.s32.totalorder %s269, %s270
      %p281 = scmp.eq.s32.totalorder %s25, 0
      %p282 = por %p280, %p281
      %p283 = scmp.ne.s32.totalorder %s269, %s270
      %p284 = scmp.eq.s32.totalorder %s26, 1
      %p285 = por %p283, %p284
      %p287 = scmp.ne.s32.totalorder %s270, %s286
      %p288 = scmp.eq.s32.totalorder %s26, 0
      %p289 = por %p287, %p288
      %p290 = scmp.le.s32.totalorder 1, %s20
      %p291 = scmp.lt.s32.totalorder %s20, 3
      %p292 = pnand %p290, %p291
      %p293 = pneg %p292
      // Predicated region
      $region9: #{tpu_custom_call.1} parent=5 // pred_check
        _
      $region10: #{tpu_custom_call.1} parent=5 // pred_check_branch
        %295 = sbr.rel (%p292) target = $region12
      $region11: #{tpu_custom_call.1} parent=5 // pred_region
        %s296 = ssub.s32 %s20, 1
        // Predicated region
        $region13: #{tpu_custom_call.1} parent=11 // pred_check
          %p297 = pneg %p67
        $region14: #{tpu_custom_call.1} parent=11 // pred_check_branch
          %299 = sbr.rel (%p297) target = $region16
        $region15: #{tpu_custom_call.1} parent=11 // pred_region
          _
        $region16: #{tpu_custom_call.1} parent=11 // pred_fallthru
          _
        // Predicated region
        $region17: #{tpu_custom_call.1} parent=11 // pred_check
          %p300 = pneg %p88
        $region18: #{tpu_custom_call.1} parent=11 // pred_check_branch
          %302 = sbr.rel (%p300) target = $region20
        $region19: #{tpu_custom_call.1} parent=11 // pred_region
          _
        $region20: #{tpu_custom_call.1} parent=11 // pred_fallthru
          _
        // Predicated region
        $region21: #{tpu_custom_call.1} parent=11 // pred_check
          %p303 = pneg %p109
        $region22: #{tpu_custom_call.1} parent=11 // pred_check_branch
          %305 = sbr.rel (%p303) target = $region24
        $region23: #{tpu_custom_call.1} parent=11 // pred_region
          _
        $region24: #{tpu_custom_call.1} parent=11 // pred_fallthru
          _
        // Predicated region
        $region25: #{tpu_custom_call.1} parent=11 // pred_check
          %p306 = pneg %p130
        $region26: #{tpu_custom_call.1} parent=11 // pred_check_branch
          %308 = sbr.rel (%p306) target = $region28
        $region27: #{tpu_custom_call.1} parent=11 // pred_region
          _
        $region28: #{tpu_custom_call.1} parent=11 // pred_fallthru
          _
        // Predicated region
        $region29: #{tpu_custom_call.1} parent=11 // pred_check
          %p309 = pneg %p151
        $region30: #{tpu_custom_call.1} parent=11 // pred_check_branch
          %311 = sbr.rel (%p309) target = $region32
        $region31: #{tpu_custom_call.1} parent=11 // pred_region
          _
        $region32: #{tpu_custom_call.1} parent=11 // pred_fallthru
          _
        // Predicated region
        $region33: #{tpu_custom_call.1} parent=11 // pred_check
          %p312 = pneg %p172
        $region34: #{tpu_custom_call.1} parent=11 // pred_check_branch
          %314 = sbr.rel (%p312) target = $region36
        $region35: #{tpu_custom_call.1} parent=11 // pred_region
          _
        $region36: #{tpu_custom_call.1} parent=11 // pred_fallthru
          _
        // Predicated region
        $region37: #{tpu_custom_call.1} parent=11 // pred_check
          %p315 = pneg %p193
        $region38: #{tpu_custom_call.1} parent=11 // pred_check_branch
          %317 = sbr.rel (%p315) target = $region40
        $region39: #{tpu_custom_call.1} parent=11 // pred_region
          _
        $region40: #{tpu_custom_call.1} parent=11 // pred_fallthru
          _
        // Predicated region
        $region41: #{tpu_custom_call.1} parent=11 // pred_check
          %p318 = pneg %p214
        $region42: #{tpu_custom_call.1} parent=11 // pred_check_branch
          %320 = sbr.rel (%p318) target = $region44
        $region43: #{tpu_custom_call.1} parent=11 // pred_region
          _
        $region44: #{tpu_custom_call.1} parent=11 // pred_fallthru
          _
        // Predicated region
        $region45: #{tpu_custom_call.1} parent=11 // pred_check
          %p321 = pneg %p235
        $region46: #{tpu_custom_call.1} parent=11 // pred_check_branch
          %323 = sbr.rel (%p321) target = $region48
        $region47: #{tpu_custom_call.1} parent=11 // pred_region
          _
        $region48: #{tpu_custom_call.1} parent=11 // pred_fallthru
          _
        // Predicated region
        $region49: #{tpu_custom_call.1} parent=11 // pred_check
          %p324 = pneg %p256
        $region50: #{tpu_custom_call.1} parent=11 // pred_check_branch
          %326 = sbr.rel (%p324) target = $region52
        $region51: #{tpu_custom_call.1} parent=11 // pred_region
          _
        $region52: #{tpu_custom_call.1} parent=11 // pred_fallthru
          _
      $region12: #{tpu_custom_call.1} parent=5 // pred_fallthru
        _
      %p327 = scmp.lt.s32.totalorder %s20, 2
      // Predicated region
      $region53: #{tpu_custom_call.1} parent=5 // pred_check
        %p328 = pneg %p327
      $region54: #{tpu_custom_call.1} parent=5 // pred_check_branch
        %330 = sbr.rel (%p328) target = $region56
      $region55: #{tpu_custom_call.1} parent=5 // pred_region
        // Predicated region
        $region57: #{tpu_custom_call.1} parent=55 // pred_check
          %p331 = pneg %p40
        $region58: #{tpu_custom_call.1} parent=55 // pred_check_branch
          %333 = sbr.rel (%p331) target = $region60
        $region59: #{tpu_custom_call.1} parent=55 // pred_region
          %p334 = scmp.lt.s32.totalorder %s20, 1
          %s335 = scalar_select %p334, %s20, 1
          %s336 = smul.addr %s335, 8
          %s337 = scalar_lea.vmem %s0, %s336
        $region60: #{tpu_custom_call.1} parent=55 // pred_fallthru
          _
      $region56: #{tpu_custom_call.1} parent=5 // pred_fallthru
        _
      %p338 = scmp.le.s32.totalorder 1, %s20
      %p339 = scmp.lt.s32.totalorder %s20, 3
      %p340 = pnand %p338, %p339
      %p341 = pneg %p340
      // Predicated region
      $region61: #{tpu_custom_call.1} parent=5 // pred_check
        _
      $region62: #{tpu_custom_call.1} parent=5 // pred_check_branch
        %343 = sbr.rel (%p340) target = $region64
      $region63: #{tpu_custom_call.1} parent=5 // pred_region
        %s344 = ssub.s32 %s20, 1
        %p345 = scmp.lt.s32.totalorder %s25, 1
        %s346 = scalar_select %p345, %s25, 1
        %s347 = smul.addr %s346, 8
        %s348 = scalar_lea.vmem %s0, %s347
        %p349 = pneg %p46
        %p350 = pneg %p43
        %p351 = pneg %p67
        %p352 = pneg %p64
        %p353 = pneg %p88
        %p354 = pneg %p85
        %p355 = pneg %p109
        %p356 = pneg %p106
        %p357 = pneg %p130
        %p358 = pneg %p127
        %p359 = pneg %p151
        %p360 = pneg %p148
        %p361 = pneg %p172
        %p362 = pneg %p169
        %p363 = pneg %p193
        %p364 = pneg %p190
        %p365 = pneg %p214
        %p366 = pneg %p211
        %p367 = pneg %p235
        %p368 = pneg %p232
        %p369 = pneg %p256
        %p370 = pneg %p253
        %p371 = pneg %p282
        %p372 = pneg %p279
        %s373 = sand.u32 %s269, 1
        %s374 = scalar_lea.sflag [#allocation3], %s373
        %s375 = sand.u32 %s269, 1
        %s376 = smul.addr %s375, 8
        %s377 = scalar_lea.vmem [#allocation2], %s376
        %p378 = scmp.lt.s32.totalorder %s25, 1
        %s379 = scalar_select %p378, %s25, 1
        %s380 = smul.addr %s379, 8
        %s381 = scalar_lea.vmem %s0, %s380
        %v383 = vld [vmem:[%s381] sm:$0xff]
        %385 = vset.pattern.permute.xlu0 0
        %386 = vperm.xlu0 %385, %v383
        %v387 = vpop.permute.xlu0 %386
        %389 = vrot.lane.b32.xlu0 %v383, 126
        %v390 = vpop.permute.xlu0 %389
        %vm392 = vcmask 1031168
        %v393 = vsel %vm392, %v387, %v390
        %395 = vrot.lane.b32.xlu0 %v387, 127
        %v396 = vpop.permute.xlu0 %395
        %397 = vrot.lane.b32.xlu0 %v393, 127
        %v398 = vpop.permute.xlu0 %397
        %399 = vrot.lane.b32.xlu0 %v390, 127
        %v400 = vpop.permute.xlu0 %399
        %vm401 = vcmask 1039360
        %v402 = vsel %vm401, %v396, %v398
        %v403 = vsel %vm401, %v398, %v400
        %408 = vrot.lane.b32.xlu0 %v387, 126
        %v409 = vpop.permute.xlu0 %408
        %410 = vrot.lane.b32.xlu0 %v393, 126
        %v411 = vpop.permute.xlu0 %410
        %412 = vrot.lane.b32.xlu0 %v390, 126
        %v413 = vpop.permute.xlu0 %412
        %v414 = vsel %vm392, %v409, %v411
        %v415 = vsel %vm392, %v411, %v413
        %420 = vrot.lane.b32.xlu0 %v387, 125
        %v421 = vpop.permute.xlu0 %420
        %422 = vrot.lane.b32.xlu0 %v393, 125
        %v423 = vpop.permute.xlu0 %422
        %424 = vrot.lane.b32.xlu0 %v390, 125
        %v425 = vpop.permute.xlu0 %424
        %vm426 = vcmask 1022976
        %v427 = vsel %vm426, %v421, %v423
        %v428 = vsel %vm426, %v423, %v425
        %433 = vrot.lane.b32.xlu0 %v387, 124
        %v434 = vpop.permute.xlu0 %433
        %435 = vrot.lane.b32.xlu0 %v393, 124
        %v436 = vpop.permute.xlu0 %435
        %437 = vrot.lane.b32.xlu0 %v390, 124
        %v438 = vpop.permute.xlu0 %437
        %vm439 = vcmask 1014784
        %v440 = vsel %vm439, %v434, %v436
        %v441 = vsel %vm439, %v436, %v438
        %446 = vrot.lane.b32.xlu0 %v387, 123
        %v447 = vpop.permute.xlu0 %446
        %448 = vrot.lane.b32.xlu0 %v393, 123
        %v449 = vpop.permute.xlu0 %448
        %450 = vrot.lane.b32.xlu0 %v390, 123
        %v451 = vpop.permute.xlu0 %450
        %vm452 = vcmask 1006592
        %v453 = vsel %vm452, %v447, %v449
        %v454 = vsel %vm452, %v449, %v451
        %459 = vrot.lane.b32.xlu0 %v387, 122
        %v460 = vpop.permute.xlu0 %459
        %461 = vrot.lane.b32.xlu0 %v393, 122
        %v462 = vpop.permute.xlu0 %461
        %463 = vrot.lane.b32.xlu0 %v390, 122
        %v464 = vpop.permute.xlu0 %463
        %vm465 = vcmask 998400
        %v466 = vsel %vm465, %v460, %v462
        %v467 = vsel %vm465, %v462, %v464
        %v472 = vpack.c.bf16 %v396, %v387
        %v473 = vpack.c.bf16 %v402, %v387
        %v474 = vpack.c.bf16 %v403, %v393
        %v475 = vpack.c.bf16 %v400, %v390
        %v476 = vpack.c.bf16 %v421, %v409
        %v477 = vpack.c.bf16 %v427, %v414
        %v478 = vpack.c.bf16 %v428, %v415
        %v479 = vpack.c.bf16 %v425, %v413
        %v480 = vpack.c.bf16 %v447, %v434
        %v481 = vpack.c.bf16 %v453, %v440
        %v482 = vpack.c.bf16 %v454, %v441
        %v483 = vpack.c.bf16 %v451, %v438
        %v484 = vpack.c.bf16 %v460, %v460
        %v485 = vpack.c.bf16 %v466, %v466
        %v486 = vpack.c.bf16 %v467, %v467
        %v487 = vpack.c.bf16 %v464, %v464
        %v488 = vld [vmem:[%s1] sm:$0xf]
        %v489 = vld [vmem:[%s1 + $0x4] sm:$0xf]
        %v492 = vunpack.c.l.b16 %v488
        %v493 = vunpack.c.l.b16 %v489
        %v494 = vpack.c.b16 %v493, %v492
        %vm495 = vcmask 457728
        %v497 = vsel %vm495, %v494, 0
        %vm499 = vcmask 1043456
        %v501 = vsel %vm499, %v484, 0
        %v504 = vsel %vm499, %v485, 0
        %v507 = vsel %vm499, %v486, 0
        %v510 = vsel %vm499, %v487, 0
        %512 = vmatprep.subr.bf16.mxu0 %v472
        %513 = vmatpush1.bf16.msra.mxu0 %v472
        %514 = vmatprep.subr.bf16.mxu0 %v476
        %515 = vmatpush1.bf16.msra.mxu0 %v476
        %516 = vmatprep.subr.bf16.mxu0 %v480
        %517 = vmatpush1.bf16.msra.mxu0 %v480
        %518 = vmatprep.subr.bf16.mxu0 %v501
        %519 = vmatpush1.bf16.msra.mxu0 %v501
        %520 = vmatprep.subr.bf16.mxu0 0
        %521 = vmatpush1.bf16.msra.mxu0 0
        %522 = vmatprep.subr.bf16.mxu0 0
        %523 = vmatpush1.bf16.msra.mxu0 0
        %524 = vmatprep.subr.bf16.mxu0 0
        %525 = vmatpush1.bf16.msra.mxu0 0
        %526 = vmatprep.subr.bf16.mxu0 0
        %527 = vmatpush1.bf16.msra.mxu0 0
        %528 = vmatprep.subr.bf16.mxu0 0
        %529 = vmatpush1.bf16.msra.mxu0 0
        %530 = vmatprep.subr.bf16.mxu0 0
        %531 = vmatpush1.bf16.msra.mxu0 0
        %532 = vmatprep.subr.bf16.mxu0 0
        %533 = vmatpush1.bf16.msra.mxu0 0
        %534 = vmatprep.subr.bf16.mxu0 0
        %535 = vmatpush1.bf16.msra.mxu0 0
        %536 = vmatprep.subr.bf16.mxu0 0
        %537 = vmatpush1.bf16.msra.mxu0 0
        %538 = vmatprep.subr.bf16.mxu0 0
        %539 = vmatpush1.bf16.msra.mxu0 0
        %540 = vmatprep.subr.bf16.mxu0 0
        %541 = vmatpush1.bf16.msra.mxu0 0
        %542 = vmatprep.subr.bf16.mxu0 0
        %543 = vmatpush1.bf16.msra.mxu0 0
        %544 = vmatprep.mubr.bf16.mxu0 0
        %545 = vmatmul.mubr.bf16.gmra.mrb[0].mxu0 %v497
        %v546 = vpop.f32.mrb[0].mxu0
        %v547 = vadd.f32 0.0, %v546
        %v548 = vpop.f32.mrb[0].mxu0
        %v549 = vadd.f32 0.0, %v548
        %v550 = vpop.f32.mrb[0].mxu0
        %v551 = vadd.f32 0.0, %v550
        %v552 = vpop.f32.mrb[0].mxu0
        %v553 = vadd.f32 0.0, %v552
        %554 = vdwg.mxu0
        %555 = vmatprep.subr.bf16.mxu0 %v474
        %556 = vmatpush1.bf16.msra.mxu0 %v473
        %557 = vmatprep.subr.bf16.mxu0 %v478
        %558 = vmatpush1.bf16.msra.mxu0 %v477
        %559 = vmatprep.subr.bf16.mxu0 %v482
        %560 = vmatpush1.bf16.msra.mxu0 %v481
        %561 = vmatprep.subr.bf16.mxu0 %v507
        %562 = vmatpush1.bf16.msra.mxu0 %v504
        %563 = vmatprep.subr.bf16.mxu0 0
        %564 = vmatpush1.bf16.msra.mxu0 0
        %565 = vmatprep.subr.bf16.mxu0 0
        %566 = vmatpush1.bf16.msra.mxu0 0
        %567 = vmatprep.subr.bf16.mxu0 0
        %568 = vmatpush1.bf16.msra.mxu0 0
        %569 = vmatprep.subr.bf16.mxu0 0
        %570 = vmatpush1.bf16.msra.mxu0 0
        %571 = vmatprep.subr.bf16.mxu0 0
        %572 = vmatpush1.bf16.msra.mxu0 0
        %573 = vmatprep.subr.bf16.mxu0 0
        %574 = vmatpush1.bf16.msra.mxu0 0
        %575 = vmatprep.subr.bf16.mxu0 0
        %576 = vmatpush1.bf16.msra.mxu0 0
        %577 = vmatprep.subr.bf16.mxu0 0
        %578 = vmatpush1.bf16.msra.mxu0 0
        %579 = vmatprep.subr.bf16.mxu0 0
        %580 = vmatpush1.bf16.msra.mxu0 0
        %581 = vmatprep.subr.bf16.mxu0 0
        %582 = vmatpush1.bf16.msra.mxu0 0
        %583 = vmatprep.subr.bf16.mxu0 0
        %584 = vmatpush1.bf16.msra.mxu0 0
        %585 = vmatprep.subr.bf16.mxu0 0
        %586 = vmatpush1.bf16.msra.mxu0 0
        %587 = vmatprep.mubr.bf16.mxu0 0
        %588 = vmatmul.mubr.bf16.gmra.mrb[0].mxu0 %v497
        %v589 = vpop.f32.mrb[0].mxu0
        %v590 = vadd.f32 0.0, %v589
        %v591 = vpop.f32.mrb[0].mxu0
        %v592 = vadd.f32 0.0, %v591
        %v593 = vpop.f32.mrb[0].mxu0
        %v594 = vadd.f32 0.0, %v593
        %v595 = vpop.f32.mrb[0].mxu0
        %v596 = vadd.f32 0.0, %v595
        %597 = vdwg.mxu0
        %598 = vmatprep.subr.bf16.mxu0 0
        %599 = vmatpush1.bf16.msra.mxu0 %v475
        %600 = vmatprep.subr.bf16.mxu0 0
        %601 = vmatpush1.bf16.msra.mxu0 %v479
        %602 = vmatprep.subr.bf16.mxu0 0
        %603 = vmatpush1.bf16.msra.mxu0 %v483
        %604 = vmatprep.subr.bf16.mxu0 0
        %605 = vmatpush1.bf16.msra.mxu0 %v510
        %606 = vmatprep.subr.bf16.mxu0 0
        %607 = vmatpush1.bf16.msra.mxu0 0
        %608 = vmatprep.subr.bf16.mxu0 0
        %609 = vmatpush1.bf16.msra.mxu0 0
        %610 = vmatprep.subr.bf16.mxu0 0
        %611 = vmatpush1.bf16.msra.mxu0 0
        %612 = vmatprep.subr.bf16.mxu0 0
        %613 = vmatpush1.bf16.msra.mxu0 0
        %614 = vmatprep.subr.bf16.mxu0 0
        %615 = vmatpush1.bf16.msra.mxu0 0
        %616 = vmatprep.subr.bf16.mxu0 0
        %617 = vmatpush1.bf16.msra.mxu0 0
        %618 = vmatprep.subr.bf16.mxu0 0
        %619 = vmatpush1.bf16.msra.mxu0 0
        %620 = vmatprep.subr.bf16.mxu0 0
        %621 = vmatpush1.bf16.msra.mxu0 0
        %622 = vmatprep.subr.bf16.mxu0 0
        %623 = vmatpush1.bf16.msra.mxu0 0
        %624 = vmatprep.subr.bf16.mxu0 0
        %625 = vmatpush1.bf16.msra.mxu0 0
        %626 = vmatprep.subr.bf16.mxu0 0
        %627 = vmatpush1.bf16.msra.mxu0 0
        %628 = vmatprep.subr.bf16.mxu0 0
        %629 = vmatpush1.bf16.msra.mxu0 0
        %630 = vmatprep.mubr.bf16.mxu0 0
        %631 = vmatmul.mubr.bf16.gmra.mrb[0].mxu0 %v497
        %v632 = vpop.f32.mrb[0].mxu0
        %v633 = vadd.f32 0.0, %v632
        %v634 = vpop.f32.mrb[0].mxu0
        %v635 = vpop.f32.mrb[0].mxu0
        %v636 = vadd.f32 0.0, %v635
        %v637 = vpop.f32.mrb[0].mxu0
        %638 = vdwg.mxu0
        %v639 = vld [vmem:[%s2] sm:$0xff]
        %v640 = vld [vmem:[%s2 + $0x8] sm:$0xff]
        %642 = vset.pattern.permute.xlu0 0
        %643 = vperm.xlu0 %642, %v639
        %v644 = vpop.permute.xlu0 %643
        %647 = vset.pattern.permute.xlu0 0
        %648 = vperm.xlu0 %647, %v640
        %v649 = vpop.permute.xlu0 %648
        %v651 = vmul.f32 %v547, %v644
        %v652 = vmul.f32 %v549, %v644
        %v653 = vmul.f32 %v590, %v644
        %v654 = vmul.f32 %v592, %v644
        %v655 = vmul.f32 %v633, %v644
        %v656 = vmul.f32 %v551, %v649
        %v657 = vmul.f32 %v553, %v649
        %v658 = vmul.f32 %v594, %v649
        %v659 = vmul.f32 %v596, %v649
        %v660 = vmul.f32 %v636, %v649
        %661 = vset.pattern.permute.xlu0 1
        %662 = vperm.xlu0 %661, %v639
        %v663 = vpop.permute.xlu0 %662
        %665 = vset.pattern.permute.xlu0 1
        %666 = vperm.xlu0 %665, %v640
        %v667 = vpop.permute.xlu0 %666
        %v669 = vadd.f32 %v651, %v663
        %v670 = vadd.f32 %v652, %v663
        %v671 = vadd.f32 %v653, %v663
        %v672 = vadd.f32 %v654, %v663
        %v673 = vadd.f32 %v655, %v663
        %v674 = vadd.f32 %v656, %v667
        %v675 = vadd.f32 %v657, %v667
        %v676 = vadd.f32 %v658, %v667
        %v677 = vadd.f32 %v659, %v667
        %v678 = vadd.f32 %v660, %v667
        %v679 = vmul.f32 %v669, 0.5
        %v680 = vmul.f32 %v670, 0.5
        %v681 = vmul.f32 %v671, 0.5
        %v682 = vmul.f32 %v672, 0.5
        %v683 = vmul.f32 %v673, 0.5
        %v684 = vmul.f32 %v674, 0.5
        %v685 = vmul.f32 %v675, 0.5
        %v686 = vmul.f32 %v676, 0.5
        %v687 = vmul.f32 %v677, 0.5
        %v688 = vmul.f32 %v678, 0.5
        %v689 = vmul.f32 %v669, 0.70710677
        %v690 = vmul.f32 %v670, 0.70710677
        %v691 = vmul.f32 %v671, 0.70710677
        %v692 = vmul.f32 %v672, 0.70710677
        %v693 = vmul.f32 %v673, 0.70710677
        %v694 = vmul.f32 %v674, 0.70710677
        %v695 = vmul.f32 %v675, 0.70710677
        %v696 = vmul.f32 %v676, 0.70710677
        %v697 = vmul.f32 %v677, 0.70710677
        %v698 = vmul.f32 %v678, 0.70710677
        %v699 = verf.f32.pop %v689
        %v700 = verf.f32.pop %v690
        %v701 = verf.f32.pop %v691
        %v702 = verf.f32.pop %v692
        %v703 = verf.f32.pop %v693
        %v704 = verf.f32.pop %v694
        %v705 = verf.f32.pop %v695
        %v706 = verf.f32.pop %v696
        %v707 = verf.f32.pop %v697
        %v708 = verf.f32.pop %v698
        %v709 = vadd.f32 %v699, 1.0
        %v710 = vadd.f32 %v700, 1.0
        %v711 = vadd.f32 %v701, 1.0
        %v712 = vadd.f32 %v702, 1.0
        %v713 = vadd.f32 %v703, 1.0
        %v714 = vadd.f32 %v704, 1.0
        %v715 = vadd.f32 %v705, 1.0
        %v716 = vadd.f32 %v706, 1.0
        %v717 = vadd.f32 %v707, 1.0
        %v718 = vadd.f32 %v708, 1.0
        %v719 = vmul.f32 %v679, %v709
        %v720 = vmul.f32 %v680, %v710
        %v721 = vmul.f32 %v681, %v711
        %v722 = vmul.f32 %v682, %v712
        %v723 = vmul.f32 %v683, %v713
        %v724 = vmul.f32 %v684, %v714
        %v725 = vmul.f32 %v685, %v715
        %v726 = vmul.f32 %v686, %v716
        %v727 = vmul.f32 %v687, %v717
        %v728 = vmul.f32 %v688, %v718
        %v729 = vpack.c.bf16 %v724, %v719
        %v730 = vpack.c.bf16 %v725, %v720
        %v731 = vpack.c.bf16 %v726, %v721
        %v732 = vpack.c.bf16 %v727, %v722
        %v733 = vpack.c.bf16 %v728, %v723
        %739 = vrot.lane.b32.xlu0 %v729, 124
        %v740 = vpop.permute.xlu0 %739
        %741 = vrot.lane.b32.xlu0 %v730, 124
        %v742 = vpop.permute.xlu0 %741
        %743 = vrot.lane.b32.xlu0 %v731, 124
        %v744 = vpop.permute.xlu0 %743
        %745 = vrot.lane.b32.xlu0 %v732, 124
        %v746 = vpop.permute.xlu0 %745
        %747 = vrot.lane.b32.xlu0 %v733, 124
        %v748 = vpop.permute.xlu0 %747
        %vm749 = vcmask 1014784
        %v750 = vsel %vm749, %v740, %v742
        %v751 = vsel %vm749, %v742, %v744
        %v752 = vsel %vm749, %v744, %v746
        %v753 = vsel %vm749, %v746, %v748
        %759 = vrot.lane.b32.xlu0 %v729, 120
        %v760 = vpop.permute.xlu0 %759
        %761 = vrot.lane.b32.xlu0 %v730, 120
        %v762 = vpop.permute.xlu0 %761
        %763 = vrot.lane.b32.xlu0 %v731, 120
        %v764 = vpop.permute.xlu0 %763
        %765 = vrot.lane.b32.xlu0 %v732, 120
        %v766 = vpop.permute.xlu0 %765
        %767 = vrot.lane.b32.xlu0 %v733, 120
        %v768 = vpop.permute.xlu0 %767
        %vm769 = vcmask 982016
        %v770 = vsel %vm769, %v760, %v762
        %v771 = vsel %vm769, %v762, %v764
        %v772 = vsel %vm769, %v764, %v766
        %v773 = vsel %vm769, %v766, %v768
        %779 = vrot.lane.b32.xlu0 %v729, 116
        %v780 = vpop.permute.xlu0 %779
        %781 = vrot.lane.b32.xlu0 %v730, 116
        %v782 = vpop.permute.xlu0 %781
        %783 = vrot.lane.b32.xlu0 %v731, 116
        %v784 = vpop.permute.xlu0 %783
        %785 = vrot.lane.b32.xlu0 %v732, 116
        %v786 = vpop.permute.xlu0 %785
        %787 = vrot.lane.b32.xlu0 %v733, 116
        %v788 = vpop.permute.xlu0 %787
        %vm789 = vcmask 949248
        %v790 = vsel %vm789, %v780, %v782
        %v791 = vsel %vm789, %v782, %v784
        %v792 = vsel %vm789, %v784, %v786
        %v793 = vsel %vm789, %v786, %v788
        %799 = vrot.lane.b32.xlu0 %v729, 112
        %v800 = vpop.permute.xlu0 %799
        %801 = vrot.lane.b32.xlu0 %v730, 112
        %v802 = vpop.permute.xlu0 %801
        %803 = vrot.lane.b32.xlu0 %v731, 112
        %v804 = vpop.permute.xlu0 %803
        %805 = vrot.lane.b32.xlu0 %v732, 112
        %v806 = vpop.permute.xlu0 %805
        %807 = vrot.lane.b32.xlu0 %v733, 112
        %v808 = vpop.permute.xlu0 %807
        %vm809 = vcmask 916480
        %v810 = vsel %vm809, %v800, %v802
        %v811 = vsel %vm809, %v802, %v804
        %v812 = vsel %vm809, %v804, %v806
        %v813 = vsel %vm809, %v806, %v808
        %819 = vrot.lane.b32.xlu0 %v729, 108
        %v820 = vpop.permute.xlu0 %819
        %821 = vrot.lane.b32.xlu0 %v730, 108
        %v822 = vpop.permute.xlu0 %821
        %823 = vrot.lane.b32.xlu0 %v731, 108
        %v824 = vpop.permute.xlu0 %823
        %825 = vrot.lane.b32.xlu0 %v732, 108
        %v826 = vpop.permute.xlu0 %825
        %827 = vrot.lane.b32.xlu0 %v733, 108
        %v828 = vpop.permute.xlu0 %827
        %vm829 = vcmask 883712
        %v830 = vsel %vm829, %v820, %v822
        %v831 = vsel %vm829, %v822, %v824
        %v832 = vsel %vm829, %v824, %v826
        %v833 = vsel %vm829, %v826, %v828
        %839 = vrot.lane.b32.xlu0 %v729, 104
        %v840 = vpop.permute.xlu0 %839
        %841 = vrot.lane.b32.xlu0 %v730, 104
        %v842 = vpop.permute.xlu0 %841
        %843 = vrot.lane.b32.xlu0 %v731, 104
        %v844 = vpop.permute.xlu0 %843
        %845 = vrot.lane.b32.xlu0 %v732, 104
        %v846 = vpop.permute.xlu0 %845
        %847 = vrot.lane.b32.xlu0 %v733, 104
        %v848 = vpop.permute.xlu0 %847
        %vm849 = vcmask 850944
        %v850 = vsel %vm849, %v840, %v842
        %v851 = vsel %vm849, %v842, %v844
        %v852 = vsel %vm849, %v844, %v846
        %v853 = vsel %vm849, %v846, %v848
        %v859 = vld [vmem:[%s3] sm:$0xf]
        %v860 = vld [vmem:[%s3 + $0x4] sm:$0xf]
        %v861 = vld [vmem:[%s3 + $0x8] sm:$0xf]
        %v862 = vld [vmem:[%s3 + $0xc] sm:$0xf]
        %v867 = vunpack.c.l.b16 %v859
        %v868 = vunpack.c.l.b16 %v860
        %v869 = vunpack.c.l.b16 %v861
        %v870 = vunpack.c.l.b16 %v862
        %v871 = vpack.c.b16 %v868, %v867
        %v872 = vpack.c.b16 %v870, %v869
        %vm873 = vcmask 916480
        %v875 = vsel %vm873, %v871, 0
        %v878 = vsel %vm873, %v872, 0
        %880 = vmatprep.subr.bf16.mxu0 %v730
        %881 = vmatpush1.bf16.msra.mxu0 %v729
        %882 = vmatprep.subr.bf16.mxu0 %v751
        %883 = vmatpush1.bf16.msra.mxu0 %v750
        %884 = vmatprep.subr.bf16.mxu0 %v771
        %885 = vmatpush1.bf16.msra.mxu0 %v770
        %886 = vmatprep.subr.bf16.mxu0 %v791
        %887 = vmatpush1.bf16.msra.mxu0 %v790
        %888 = vmatprep.subr.bf16.mxu0 %v811
        %889 = vmatpush1.bf16.msra.mxu0 %v810
        %890 = vmatprep.subr.bf16.mxu0 %v831
        %891 = vmatpush1.bf16.msra.mxu0 %v830
        %892 = vmatprep.subr.bf16.mxu0 %v851
        %893 = vmatpush1.bf16.msra.mxu0 %v850
        %894 = vmatprep.subr.bf16.mxu0 0
        %895 = vmatpush1.bf16.msra.mxu0 0
        %896 = vmatprep.subr.bf16.mxu0 0
        %897 = vmatpush1.bf16.msra.mxu0 0
        %898 = vmatprep.subr.bf16.mxu0 0
        %899 = vmatpush1.bf16.msra.mxu0 0
        %900 = vmatprep.subr.bf16.mxu0 0
        %901 = vmatpush1.bf16.msra.mxu0 0
        %902 = vmatprep.subr.bf16.mxu0 0
        %903 = vmatpush1.bf16.msra.mxu0 0
        %904 = vmatprep.subr.bf16.mxu0 0
        %905 = vmatpush1.bf16.msra.mxu0 0
        %906 = vmatprep.subr.bf16.mxu0 0
        %907 = vmatpush1.bf16.msra.mxu0 0
        %908 = vmatprep.subr.bf16.mxu0 0
        %909 = vmatpush1.bf16.msra.mxu0 0
        %910 = vmatprep.subr.bf16.mxu0 0
        %911 = vmatpush1.bf16.msra.mxu0 0
        %912 = vmatprep.mubr.bf16.mxu0 0
        %913 = vmatmul.mubr.bf16.gmra.mrb[0].mxu0 %v875
        %v914 = vpop.f32.mrb[0].mxu0
        %v915 = vadd.f32 0.0, %v914
        %v916 = vpop.f32.mrb[0].mxu0
        %v917 = vadd.f32 0.0, %v916
        %v918 = vpop.f32.mrb[0].mxu0
        %v919 = vadd.f32 0.0, %v918
        %v920 = vpop.f32.mrb[0].mxu0
        %v921 = vadd.f32 0.0, %v920
        %922 = vmatprep.mubr.bf16.mxu0 0
        %923 = vmatmul.mubr.bf16.gmra.mrb[0].mxu0 %v878
        %v924 = vpop.f32.mrb[0].mxu0
        %v925 = vadd.f32 0.0, %v924
        %v926 = vpop.f32.mrb[0].mxu0
        %v927 = vadd.f32 0.0, %v926
        %v928 = vpop.f32.mrb[0].mxu0
        %v929 = vadd.f32 0.0, %v928
        %v930 = vpop.f32.mrb[0].mxu0
        %v931 = vadd.f32 0.0, %v930
        %932 = vdwg.mxu0
        %933 = vmatprep.subr.bf16.mxu0 %v732
        %934 = vmatpush1.bf16.msra.mxu0 %v731
        %935 = vmatprep.subr.bf16.mxu0 %v753
        %936 = vmatpush1.bf16.msra.mxu0 %v752
        %937 = vmatprep.subr.bf16.mxu0 %v773
        %938 = vmatpush1.bf16.msra.mxu0 %v772
        %939 = vmatprep.subr.bf16.mxu0 %v793
        %940 = vmatpush1.bf16.msra.mxu0 %v792
        %941 = vmatprep.subr.bf16.mxu0 %v813
        %942 = vmatpush1.bf16.msra.mxu0 %v812
        %943 = vmatprep.subr.bf16.mxu0 %v833
        %944 = vmatpush1.bf16.msra.mxu0 %v832
        %945 = vmatprep.subr.bf16.mxu0 %v853
        %946 = vmatpush1.bf16.msra.mxu0 %v852
        %947 = vmatprep.subr.bf16.mxu0 0
        %948 = vmatpush1.bf16.msra.mxu0 0
        %949 = vmatprep.subr.bf16.mxu0 0
        %950 = vmatpush1.bf16.msra.mxu0 0
        %951 = vmatprep.subr.bf16.mxu0 0
        %952 = vmatpush1.bf16.msra.mxu0 0
        %953 = vmatprep.subr.bf16.mxu0 0
        %954 = vmatpush1.bf16.msra.mxu0 0
        %955 = vmatprep.subr.bf16.mxu0 0
        %956 = vmatpush1.bf16.msra.mxu0 0
        %957 = vmatprep.subr.bf16.mxu0 0
        %958 = vmatpush1.bf16.msra.mxu0 0
        %959 = vmatprep.subr.bf16.mxu0 0
        %960 = vmatpush1.bf16.msra.mxu0 0
        %961 = vmatprep.subr.bf16.mxu0 0
        %962 = vmatpush1.bf16.msra.mxu0 0
        %963 = vmatprep.subr.bf16.mxu0 0
        %964 = vmatpush1.bf16.msra.mxu0 0
        %965 = vmatprep.mubr.bf16.mxu0 0
        %966 = vmatmul.mubr.bf16.gmra.mrb[0].mxu0 %v875
        %v967 = vpop.f32.mrb[0].mxu0
        %v968 = vadd.f32 0.0, %v967
        %v969 = vpop.f32.mrb[0].mxu0
        %v970 = vadd.f32 0.0, %v969
        %v971 = vpop.f32.mrb[0].mxu0
        %v972 = vadd.f32 0.0, %v971
        %v973 = vpop.f32.mrb[0].mxu0
        %v974 = vadd.f32 0.0, %v973
        %975 = vmatprep.mubr.bf16.mxu0 0
        %976 = vmatmul.mubr.bf16.gmra.mrb[0].mxu0 %v878
        %v977 = vpop.f32.mrb[0].mxu0
        %v978 = vadd.f32 0.0, %v977
        %v979 = vpop.f32.mrb[0].mxu0
        %v980 = vadd.f32 0.0, %v979
        %v981 = vpop.f32.mrb[0].mxu0
        %v982 = vadd.f32 0.0, %v981
        %v983 = vpop.f32.mrb[0].mxu0
        %v984 = vadd.f32 0.0, %v983
        %985 = vdwg.mxu0
        %986 = vmatprep.subr.bf16.mxu0 0
        %987 = vmatpush1.bf16.msra.mxu0 %v733
        %988 = vmatprep.subr.bf16.mxu0 0
        %989 = vmatpush1.bf16.msra.mxu0 %v748
        %990 = vmatprep.subr.bf16.mxu0 0
        %991 = vmatpush1.bf16.msra.mxu0 %v768
        %992 = vmatprep.subr.bf16.mxu0 0
        %993 = vmatpush1.bf16.msra.mxu0 %v788
        %994 = vmatprep.subr.bf16.mxu0 0
        %995 = vmatpush1.bf16.msra.mxu0 %v808
        %996 = vmatprep.subr.bf16.mxu0 0
        %997 = vmatpush1.bf16.msra.mxu0 %v828
        %998 = vmatprep.subr.bf16.mxu0 0
        %999 = vmatpush1.bf16.msra.mxu0 %v848
        %1000 = vmatprep.subr.bf16.mxu0 0
        %1001 = vmatpush1.bf16.msra.mxu0 0
        %1002 = vmatprep.subr.bf16.mxu0 0
        %1003 = vmatpush1.bf16.msra.mxu0 0
        %1004 = vmatprep.subr.bf16.mxu0 0
        %1005 = vmatpush1.bf16.msra.mxu0 0
        %1006 = vmatprep.subr.bf16.mxu0 0
        %1007 = vmatpush1.bf16.msra.mxu0 0
        %1008 = vmatprep.subr.bf16.mxu0 0
        %1009 = vmatpush1.bf16.msra.mxu0 0
        %1010 = vmatprep.subr.bf16.mxu0 0
        %1011 = vmatpush1.bf16.msra.mxu0 0
        %1012 = vmatprep.subr.bf16.mxu0 0
        %1013 = vmatpush1.bf16.msra.mxu0 0
        %1014 = vmatprep.subr.bf16.mxu0 0
        %1015 = vmatpush1.bf16.msra.mxu0 0
        %1016 = vmatprep.subr.bf16.mxu0 0
        %1017 = vmatpush1.bf16.msra.mxu0 0
        %1018 = vmatprep.mubr.bf16.mxu0 0
        %1019 = vmatmul.mubr.bf16.gmra.mrb[0].mxu0 %v875
        %v1020 = vpop.f32.mrb[0].mxu0
        %v1021 = vadd.f32 0.0, %v1020
        %v1022 = vpop.f32.mrb[0].mxu0
        %v1023 = vpop.f32.mrb[0].mxu0
        %v1024 = vadd.f32 0.0, %v1023
        %v1025 = vpop.f32.mrb[0].mxu0
        %1026 = vmatprep.mubr.bf16.mxu0 0
        %1027 = vmatmul.mubr.bf16.gmra.mrb[0].mxu0 %v878
        %v1028 = vpop.f32.mrb[0].mxu0
        %v1029 = vadd.f32 0.0, %v1028
        %v1030 = vpop.f32.mrb[0].mxu0
        %v1031 = vpop.f32.mrb[0].mxu0
        %v1032 = vadd.f32 0.0, %v1031
        %v1033 = vpop.f32.mrb[0].mxu0
        %1034 = vdwg.mxu0
        %v1035 = vld [vmem:[%s4] sm:$0xff]
        %v1036 = vld [vmem:[%s4 + $0x8] sm:$0xff]
        %v1037 = vld [vmem:[%s4 + $0x10] sm:$0xff]
        %v1038 = vld [vmem:[%s4 + $0x18] sm:$0xff]
        %1040 = vset.pattern.permute.xlu0 0
        %1041 = vperm.xlu0 %1040, %v1035
        %v1042 = vpop.permute.xlu0 %1041
        %1045 = vset.pattern.permute.xlu0 0
        %1046 = vperm.xlu0 %1045, %v1036
        %v1047 = vpop.permute.xlu0 %1046
        %1050 = vset.pattern.permute.xlu0 0
        %1051 = vperm.xlu0 %1050, %v1037
        %v1052 = vpop.permute.xlu0 %1051
        %1055 = vset.pattern.permute.xlu0 0
        %1056 = vperm.xlu0 %1055, %v1038
        %v1057 = vpop.permute.xlu0 %1056
        %v1059 = vmul.f32 %v915, %v1042
        %v1060 = vmul.f32 %v917, %v1042
        %v1061 = vmul.f32 %v968, %v1042
        %v1062 = vmul.f32 %v970, %v1042
        %v1063 = vmul.f32 %v1021, %v1042
        %v1064 = vmul.f32 %v919, %v1047
        %v1065 = vmul.f32 %v921, %v1047
        %v1066 = vmul.f32 %v972, %v1047
        %v1067 = vmul.f32 %v974, %v1047
        %v1068 = vmul.f32 %v1024, %v1047
        %v1069 = vmul.f32 %v925, %v1052
        %v1070 = vmul.f32 %v927, %v1052
        %v1071 = vmul.f32 %v978, %v1052
        %v1072 = vmul.f32 %v980, %v1052
        %v1073 = vmul.f32 %v1029, %v1052
        %v1074 = vmul.f32 %v929, %v1057
        %v1075 = vmul.f32 %v931, %v1057
        %v1076 = vmul.f32 %v982, %v1057
        %v1077 = vmul.f32 %v984, %v1057
        %v1078 = vmul.f32 %v1032, %v1057
        %1079 = vset.pattern.permute.xlu0 1
        %1080 = vperm.xlu0 %1079, %v1035
        %v1081 = vpop.permute.xlu0 %1080
        %1083 = vset.pattern.permute.xlu0 1
        %1084 = vperm.xlu0 %1083, %v1036
        %v1085 = vpop.permute.xlu0 %1084
        %1087 = vset.pattern.permute.xlu0 1
        %1088 = vperm.xlu0 %1087, %v1037
        %v1089 = vpop.permute.xlu0 %1088
        %1091 = vset.pattern.permute.xlu0 1
        %1092 = vperm.xlu0 %1091, %v1038
        %v1093 = vpop.permute.xlu0 %1092
        %v1095 = vadd.f32 %v1059, %v1081
        %v1096 = vadd.f32 %v1060, %v1081
        %v1097 = vadd.f32 %v1061, %v1081
        %v1098 = vadd.f32 %v1062, %v1081
        %v1099 = vadd.f32 %v1063, %v1081
        %v1100 = vadd.f32 %v1064, %v1085
        %v1101 = vadd.f32 %v1065, %v1085
        %v1102 = vadd.f32 %v1066, %v1085
        %v1103 = vadd.f32 %v1067, %v1085
        %v1104 = vadd.f32 %v1068, %v1085
        %v1105 = vadd.f32 %v1069, %v1089
        %v1106 = vadd.f32 %v1070, %v1089
        %v1107 = vadd.f32 %v1071, %v1089
        %v1108 = vadd.f32 %v1072, %v1089
        %v1109 = vadd.f32 %v1073, %v1089
        %v1110 = vadd.f32 %v1074, %v1093
        %v1111 = vadd.f32 %v1075, %v1093
        %v1112 = vadd.f32 %v1076, %v1093
        %v1113 = vadd.f32 %v1077, %v1093
        %v1114 = vadd.f32 %v1078, %v1093
        %v1115 = vmul.f32 %v1095, 0.5
        %v1116 = vmul.f32 %v1096, 0.5
        %v1117 = vmul.f32 %v1097, 0.5
        %v1118 = vmul.f32 %v1098, 0.5
        %v1119 = vmul.f32 %v1099, 0.5
        %v1120 = vmul.f32 %v1100, 0.5
        %v1121 = vmul.f32 %v1101, 0.5
        %v1122 = vmul.f32 %v1102, 0.5
        %v1123 = vmul.f32 %v1103, 0.5
        %v1124 = vmul.f32 %v1104, 0.5
        %v1125 = vmul.f32 %v1105, 0.5
        %v1126 = vmul.f32 %v1106, 0.5
        %v1127 = vmul.f32 %v1107, 0.5
        %v1128 = vmul.f32 %v1108, 0.5
        %v1129 = vmul.f32 %v1109, 0.5
        %v1130 = vmul.f32 %v1110, 0.5
        %v1131 = vmul.f32 %v1111, 0.5
        %v1132 = vmul.f32 %v1112, 0.5
        %v1133 = vmul.f32 %v1113, 0.5
        %v1134 = vmul.f32 %v1114, 0.5
        %v1135 = vmul.f32 %v1095, 0.70710677
        %v1136 = vmul.f32 %v1096, 0.70710677
        %v1137 = vmul.f32 %v1097, 0.70710677
        %v1138 = vmul.f32 %v1098, 0.70710677
        %v1139 = vmul.f32 %v1099, 0.70710677
        %v1140 = vmul.f32 %v1100, 0.70710677
        %v1141 = vmul.f32 %v1101, 0.70710677
        %v1142 = vmul.f32 %v1102, 0.70710677
        %v1143 = vmul.f32 %v1103, 0.70710677
        %v1144 = vmul.f32 %v1104, 0.70710677
        %v1145 = vmul.f32 %v1105, 0.70710677
        %v1146 = vmul.f32 %v1106, 0.70710677
        %v1147 = vmul.f32 %v1107, 0.70710677
        %v1148 = vmul.f32 %v1108, 0.70710677
        %v1149 = vmul.f32 %v1109, 0.70710677
        %v1150 = vmul.f32 %v1110, 0.70710677
        %v1151 = vmul.f32 %v1111, 0.70710677
        %v1152 = vmul.f32 %v1112, 0.70710677
        %v1153 = vmul.f32 %v1113, 0.70710677
        %v1154 = vmul.f32 %v1114, 0.70710677
        %v1155 = verf.f32.pop %v1135
        %v1156 = verf.f32.pop %v1136
        %v1157 = verf.f32.pop %v1137
        %v1158 = verf.f32.pop %v1138
        %v1159 = verf.f32.pop %v1139
        %v1160 = verf.f32.pop %v1140
        %v1161 = verf.f32.pop %v1141
        %v1162 = verf.f32.pop %v1142
        %v1163 = verf.f32.pop %v1143
        %v1164 = verf.f32.pop %v1144
        %v1165 = verf.f32.pop %v1145
        %v1166 = verf.f32.pop %v1146
        %v1167 = verf.f32.pop %v1147
        %v1168 = verf.f32.pop %v1148
        %v1169 = verf.f32.pop %v1149
        %v1170 = verf.f32.pop %v1150
        %v1171 = verf.f32.pop %v1151
        %v1172 = verf.f32.pop %v1152
        %v1173 = verf.f32.pop %v1153
        %v1174 = verf.f32.pop %v1154
        %v1175 = vadd.f32 %v1155, 1.0
        %v1176 = vadd.f32 %v1156, 1.0
        %v1177 = vadd.f32 %v1157, 1.0
        %v1178 = vadd.f32 %v1158, 1.0
        %v1179 = vadd.f32 %v1159, 1.0
        %v1180 = vadd.f32 %v1160, 1.0
        %v1181 = vadd.f32 %v1161, 1.0
        %v1182 = vadd.f32 %v1162, 1.0
        %v1183 = vadd.f32 %v1163, 1.0
        %v1184 = vadd.f32 %v1164, 1.0
        %v1185 = vadd.f32 %v1165, 1.0
        %v1186 = vadd.f32 %v1166, 1.0
        %v1187 = vadd.f32 %v1167, 1.0
        %v1188 = vadd.f32 %v1168, 1.0
        %v1189 = vadd.f32 %v1169, 1.0
        %v1190 = vadd.f32 %v1170, 1.0
        %v1191 = vadd.f32 %v1171, 1.0
        %v1192 = vadd.f32 %v1172, 1.0
        %v1193 = vadd.f32 %v1173, 1.0
        %v1194 = vadd.f32 %v1174, 1.0
        %v1195 = vmul.f32 %v1115, %v1175
        %v1196 = vmul.f32 %v1116, %v1176
        %v1197 = vmul.f32 %v1117, %v1177
        %v1198 = vmul.f32 %v1118, %v1178
        %v1199 = vmul.f32 %v1119, %v1179
        %v1200 = vmul.f32 %v1120, %v1180
        %v1201 = vmul.f32 %v1121, %v1181
        %v1202 = vmul.f32 %v1122, %v1182
        %v1203 = vmul.f32 %v1123, %v1183
        %v1204 = vmul.f32 %v1124, %v1184
        %v1205 = vmul.f32 %v1125, %v1185
        %v1206 = vmul.f32 %v1126, %v1186
        %v1207 = vmul.f32 %v1127, %v1187
        %v1208 = vmul.f32 %v1128, %v1188
        %v1209 = vmul.f32 %v1129, %v1189
        %v1210 = vmul.f32 %v1130, %v1190
        %v1211 = vmul.f32 %v1131, %v1191
        %v1212 = vmul.f32 %v1132, %v1192
        %v1213 = vmul.f32 %v1133, %v1193
        %v1214 = vmul.f32 %v1134, %v1194
        %v1215 = vpack.c.bf16 %v1200, %v1195
        %v1216 = vpack.c.bf16 %v1201, %v1196
        %v1217 = vpack.c.bf16 %v1202, %v1197
        %v1218 = vpack.c.bf16 %v1203, %v1198
        %v1219 = vpack.c.bf16 %v1204, %v1199
        %v1220 = vpack.c.bf16 %v1210, %v1205
        %v1221 = vpack.c.bf16 %v1211, %v1206
        %v1222 = vpack.c.bf16 %v1212, %v1207
        %v1223 = vpack.c.bf16 %v1213, %v1208
        %v1224 = vpack.c.bf16 %v1214, %v1209
        %1235 = vrot.lane.b32.xlu0 %v1215, 112
        %v1236 = vpop.permute.xlu0 %1235
        %1237 = vrot.lane.b32.xlu0 %v1216, 112
        %v1238 = vpop.permute.xlu0 %1237
        %1239 = vrot.lane.b32.xlu0 %v1217, 112
        %v1240 = vpop.permute.xlu0 %1239
        %1241 = vrot.lane.b32.xlu0 %v1218, 112
        %v1242 = vpop.permute.xlu0 %1241
        %1243 = vrot.lane.b32.xlu0 %v1219, 112
        %v1244 = vpop.permute.xlu0 %1243
        %1245 = vrot.lane.b32.xlu0 %v1220, 112
        %v1246 = vpop.permute.xlu0 %1245
        %1247 = vrot.lane.b32.xlu0 %v1221, 112
        %v1248 = vpop.permute.xlu0 %1247
        %1249 = vrot.lane.b32.xlu0 %v1222, 112
        %v1250 = vpop.permute.xlu0 %1249
        %1251 = vrot.lane.b32.xlu0 %v1223, 112
        %v1252 = vpop.permute.xlu0 %1251
        %1253 = vrot.lane.b32.xlu0 %v1224, 112
        %v1254 = vpop.permute.xlu0 %1253
        %v1255 = vsel %vm809, %v1236, %v1238
        %v1256 = vsel %vm809, %v1238, %v1240
        %v1257 = vsel %vm809, %v1240, %v1242
        %v1258 = vsel %vm809, %v1242, %v1244
        %v1259 = vsel %vm809, %v1246, %v1248
        %v1260 = vsel %vm809, %v1248, %v1250
        %v1261 = vsel %vm809, %v1250, %v1252
        %v1262 = vsel %vm809, %v1252, %v1254
        %1271 = vrot.lane.b32.xlu0 %v1215, 96
        %v1272 = vpop.permute.xlu0 %1271
        %1273 = vrot.lane.b32.xlu0 %v1216, 96
        %v1274 = vpop.permute.xlu0 %1273
        %1275 = vrot.lane.b32.xlu0 %v1217, 96
        %v1276 = vpop.permute.xlu0 %1275
        %1277 = vrot.lane.b32.xlu0 %v1218, 96
        %v1278 = vpop.permute.xlu0 %1277
        %1279 = vrot.lane.b32.xlu0 %v1219, 96
        %v1280 = vpop.permute.xlu0 %1279
        %1281 = vrot.lane.b32.xlu0 %v1220, 96
        %v1282 = vpop.permute.xlu0 %1281
        %1283 = vrot.lane.b32.xlu0 %v1221, 96
        %v1284 = vpop.permute.xlu0 %1283
        %1285 = vrot.lane.b32.xlu0 %v1222, 96
        %v1286 = vpop.permute.xlu0 %1285
        %1287 = vrot.lane.b32.xlu0 %v1223, 96
        %v1288 = vpop.permute.xlu0 %1287
        %1289 = vrot.lane.b32.xlu0 %v1224, 96
        %v1290 = vpop.permute.xlu0 %1289
        %vm1291 = vcmask 785408
        %v1292 = vsel %vm1291, %v1272, %v1274
        %v1293 = vsel %vm1291, %v1274, %v1276
        %v1294 = vsel %vm1291, %v1276, %v1278
        %v1295 = vsel %vm1291, %v1278, %v1280
        %v1296 = vsel %vm1291, %v1282, %v1284
        %v1297 = vsel %vm1291, %v1284, %v1286
        %v1298 = vsel %vm1291, %v1286, %v1288
        %v1299 = vsel %vm1291, %v1288, %v1290
        %1308 = vrot.lane.b32.xlu0 %v1215, 80
        %v1309 = vpop.permute.xlu0 %1308
        %1310 = vrot.lane.b32.xlu0 %v1216, 80
        %v1311 = vpop.permute.xlu0 %1310
        %1312 = vrot.lane.b32.xlu0 %v1217, 80
        %v1313 = vpop.permute.xlu0 %1312
        %1314 = vrot.lane.b32.xlu0 %v1218, 80
        %v1315 = vpop.permute.xlu0 %1314
        %1316 = vrot.lane.b32.xlu0 %v1219, 80
        %v1317 = vpop.permute.xlu0 %1316
        %1318 = vrot.lane.b32.xlu0 %v1220, 80
        %v1319 = vpop.permute.xlu0 %1318
        %1320 = vrot.lane.b32.xlu0 %v1221, 80
        %v1321 = vpop.permute.xlu0 %1320
        %1322 = vrot.lane.b32.xlu0 %v1222, 80
        %v1323 = vpop.permute.xlu0 %1322
        %1324 = vrot.lane.b32.xlu0 %v1223, 80
        %v1325 = vpop.permute.xlu0 %1324
        %1326 = vrot.lane.b32.xlu0 %v1224, 80
        %v1327 = vpop.permute.xlu0 %1326
        %vm1328 = vcmask 654336
        %v1329 = vsel %vm1328, %v1309, %v1311
        %v1330 = vsel %vm1328, %v1311, %v1313
        %v1331 = vsel %vm1328, %v1313, %v1315
        %v1332 = vsel %vm1328, %v1315, %v1317
        %v1333 = vsel %vm1328, %v1319, %v1321
        %v1334 = vsel %vm1328, %v1321, %v1323
        %v1335 = vsel %vm1328, %v1323, %v1325
        %v1336 = vsel %vm1328, %v1325, %v1327
        %1345 = vrot.lane.b32.xlu0 %v1215, 64
        %v1346 = vpop.permute.xlu0 %1345
        %1347 = vrot.lane.b32.xlu0 %v1216, 64
        %v1348 = vpop.permute.xlu0 %1347
        %1349 = vrot.lane.b32.xlu0 %v1217, 64
        %v1350 = vpop.permute.xlu0 %1349
        %1351 = vrot.lane.b32.xlu0 %v1218, 64
        %v1352 = vpop.permute.xlu0 %1351
        %1353 = vrot.lane.b32.xlu0 %v1219, 64
        %v1354 = vpop.permute.xlu0 %1353
        %1355 = vrot.lane.b32.xlu0 %v1220, 64
        %v1356 = vpop.permute.xlu0 %1355
        %1357 = vrot.lane.b32.xlu0 %v1221, 64
        %v1358 = vpop.permute.xlu0 %1357
        %1359 = vrot.lane.b32.xlu0 %v1222, 64
        %v1360 = vpop.permute.xlu0 %1359
        %1361 = vrot.lane.b32.xlu0 %v1223, 64
        %v1362 = vpop.permute.xlu0 %1361
        %1363 = vrot.lane.b32.xlu0 %v1224, 64
        %v1364 = vpop.permute.xlu0 %1363
        %vm1365 = vcmask 523264
        %v1366 = vsel %vm1365, %v1346, %v1348
        %v1367 = vsel %vm1365, %v1348, %v1350
        %v1368 = vsel %vm1365, %v1350, %v1352
        %v1369 = vsel %vm1365, %v1352, %v1354
        %v1370 = vsel %vm1365, %v1356, %v1358
        %v1371 = vsel %vm1365, %v1358, %v1360
        %v1372 = vsel %vm1365, %v1360, %v1362
        %v1373 = vsel %vm1365, %v1362, %v1364
        %1382 = vrot.lane.b32.xlu0 %v1215, 48
        %v1383 = vpop.permute.xlu0 %1382
        %1384 = vrot.lane.b32.xlu0 %v1216, 48
        %v1385 = vpop.permute.xlu0 %1384
        %1386 = vrot.lane.b32.xlu0 %v1217, 48
        %v1387 = vpop.permute.xlu0 %1386
        %1388 = vrot.lane.b32.xlu0 %v1218, 48
        %v1389 = vpop.permute.xlu0 %1388
        %1390 = vrot.lane.b32.xlu0 %v1219, 48
        %v1391 = vpop.permute.xlu0 %1390
        %1392 = vrot.lane.b32.xlu0 %v1220, 48
        %v1393 = vpop.permute.xlu0 %1392
        %1394 = vrot.lane.b32.xlu0 %v1221, 48
        %v1395 = vpop.permute.xlu0 %1394
        %1396 = vrot.lane.b32.xlu0 %v1222, 48
        %v1397 = vpop.permute.xlu0 %1396
        %1398 = vrot.lane.b32.xlu0 %v1223, 48
        %v1399 = vpop.permute.xlu0 %1398
        %1400 = vrot.lane.b32.xlu0 %v1224, 48
        %v1401 = vpop.permute.xlu0 %1400
        %vm1402 = vcmask 392192
        %v1403 = vsel %vm1402, %v1383, %v1385
        %v1404 = vsel %vm1402, %v1385, %v1387
        %v1405 = vsel %vm1402, %v1387, %v1389
        %v1406 = vsel %vm1402, %v1389, %v1391
        %v1407 = vsel %vm1402, %v1393, %v1395
        %v1408 = vsel %vm1402, %v1395, %v1397
        %v1409 = vsel %vm1402, %v1397, %v1399
        %v1410 = vsel %vm1402, %v1399, %v1401
        %1419 = vrot.lane.b32.xlu0 %v1215, 32
        %v1420 = vpop.permute.xlu0 %1419
        %1421 = vrot.lane.b32.xlu0 %v1216, 32
        %v1422 = vpop.permute.xlu0 %1421
        %1423 = vrot.lane.b32.xlu0 %v1217, 32
        %v1424 = vpop.permute.xlu0 %1423
        %1425 = vrot.lane.b32.xlu0 %v1218, 32
        %v1426 = vpop.permute.xlu0 %1425
        %1427 = vrot.lane.b32.xlu0 %v1219, 32
        %v1428 = vpop.permute.xlu0 %1427
        %1429 = vrot.lane.b32.xlu0 %v1220, 32
        %v1430 = vpop.permute.xlu0 %1429
        %1431 = vrot.lane.b32.xlu0 %v1221, 32
        %v1432 = vpop.permute.xlu0 %1431
        %1433 = vrot.lane.b32.xlu0 %v1222, 32
        %v1434 = vpop.permute.xlu0 %1433
        %1435 = vrot.lane.b32.xlu0 %v1223, 32
        %v1436 = vpop.permute.xlu0 %1435
        %1437 = vrot.lane.b32.xlu0 %v1224, 32
        %v1438 = vpop.permute.xlu0 %1437
        %vm1439 = vcmask 261120
        %v1440 = vsel %vm1439, %v1420, %v1422
        %v1441 = vsel %vm1439, %v1422, %v1424
        %v1442 = vsel %vm1439, %v1424, %v1426
        %v1443 = vsel %vm1439, %v1426, %v1428
        %v1444 = vsel %vm1439, %v1430, %v1432
        %v1445 = vsel %vm1439, %v1432, %v1434
        %v1446 = vsel %vm1439, %v1434, %v1436
        %v1447 = vsel %vm1439, %v1436, %v1438
        %v1456 = vld [vmem:[%s5] sm:$0xff]
        %v1457 = vld [vmem:[%s5 + $0x8] sm:$0xff]
        %v1458 = vld [vmem:[%s5 + $0x10] sm:$0xff]
        %v1459 = vld [vmem:[%s5 + $0x18] sm:$0xff]
        %v1460 = vld [vmem:[%s5 + $0x20] sm:$0xff]
        %v1461 = vld [vmem:[%s5 + $0x28] sm:$0xff]
        %v1462 = vld [vmem:[%s5 + $0x30] sm:$0xff]
        %v1463 = vld [vmem:[%s5 + $0x38] sm:$0xff]
        %v1472 = vunpack.c.l.b16 %v1456
        %v1473 = vunpack.c.h.b16 %v1456
        %v1474 = vunpack.c.l.b16 %v1457
        %v1475 = vunpack.c.h.b16 %v1457
        %v1476 = vunpack.c.l.b16 %v1458
        %v1477 = vunpack.c.h.b16 %v1458
        %v1478 = vunpack.c.l.b16 %v1459
        %v1479 = vunpack.c.h.b16 %v1459
        %v1480 = vunpack.c.l.b16 %v1460
        %v1481 = vunpack.c.h.b16 %v1460
        %v1482 = vunpack.c.l.b16 %v1461
        %v1483 = vunpack.c.h.b16 %v1461
        %v1484 = vunpack.c.l.b16 %v1462
        %v1485 = vunpack.c.h.b16 %v1462
        %v1486 = vunpack.c.l.b16 %v1463
        %v1487 = vunpack.c.h.b16 %v1463
        %v1488 = vpack.c.b16 %v1474, %v1472
        %v1489 = vpack.c.b16 %v1475, %v1473
        %v1490 = vpack.c.b16 %v1478, %v1476
        %v1491 = vpack.c.b16 %v1479, %v1477
        %v1492 = vpack.c.b16 %v1482, %v1480
        %v1493 = vpack.c.b16 %v1483, %v1481
        %v1494 = vpack.c.b16 %v1486, %v1484
        %v1495 = vpack.c.b16 %v1487, %v1485
        %vm1500 = vcmask 785408
        %v1502 = vsel %vm1500, %v1489, 0
        %v1505 = vsel %vm1500, %v1491, 0
        %v1508 = vsel %vm1500, %v1493, 0
        %v1511 = vsel %vm1500, %v1495, 0
        %1513 = vmatprep.subr.bf16.mxu0 %v1216
        %1514 = vmatpush1.bf16.msra.mxu0 %v1215
        %1515 = vmatprep.subr.bf16.mxu0 %v1221
        %1516 = vmatpush1.bf16.msra.mxu0 %v1220
        %1517 = vmatprep.subr.bf16.mxu0 %v1256
        %1518 = vmatpush1.bf16.msra.mxu0 %v1255
        %1519 = vmatprep.subr.bf16.mxu0 %v1260
        %1520 = vmatpush1.bf16.msra.mxu0 %v1259
        %1521 = vmatprep.subr.bf16.mxu0 %v1293
        %1522 = vmatpush1.bf16.msra.mxu0 %v1292
        %1523 = vmatprep.subr.bf16.mxu0 %v1297
        %1524 = vmatpush1.bf16.msra.mxu0 %v1296
        %1525 = vmatprep.subr.bf16.mxu0 %v1330
        %1526 = vmatpush1.bf16.msra.mxu0 %v1329
        %1527 = vmatprep.subr.bf16.mxu0 %v1334
        %1528 = vmatpush1.bf16.msra.mxu0 %v1333
        %1529 = vmatprep.subr.bf16.mxu0 %v1367
        %1530 = vmatpush1.bf16.msra.mxu0 %v1366
        %1531 = vmatprep.subr.bf16.mxu0 %v1371
        %1532 = vmatpush1.bf16.msra.mxu0 %v1370
        %1533 = vmatprep.subr.bf16.mxu0 %v1404
        %1534 = vmatpush1.bf16.msra.mxu0 %v1403
        %1535 = vmatprep.subr.bf16.mxu0 %v1408
        %1536 = vmatpush1.bf16.msra.mxu0 %v1407
        %1537 = vmatprep.subr.bf16.mxu0 %v1441
        %1538 = vmatpush1.bf16.msra.mxu0 %v1440
        %1539 = vmatprep.subr.bf16.mxu0 %v1445
        %1540 = vmatpush1.bf16.msra.mxu0 %v1444
        %1541 = vmatprep.subr.bf16.mxu0 0
        %1542 = vmatpush1.bf16.msra.mxu0 0
        %1543 = vmatprep.subr.bf16.mxu0 0
        %1544 = vmatpush1.bf16.msra.mxu0 0
        %1545 = vmatprep.mubr.bf16.mxu0 %v1502
        %1546 = vmatmul.mubr.bf16.gmra.mrb[0].mxu0 %v1488
        %v1547 = vpop.f32.mrb[0].mxu0
        %v1548 = vadd.f32 0.0, %v1547
        %v1549 = vpop.f32.mrb[0].mxu0
        %v1550 = vadd.f32 0.0, %v1549
        %v1551 = vpop.f32.mrb[0].mxu0
        %v1552 = vadd.f32 0.0, %v1551
        %v1553 = vpop.f32.mrb[0].mxu0
        %v1554 = vadd.f32 0.0, %v1553
        %1555 = vmatprep.mubr.bf16.mxu0 %v1505
        %1556 = vmatmul.mubr.bf16.gmra.mrb[0].mxu0 %v1490
        %v1557 = vpop.f32.mrb[0].mxu0
        %v1558 = vadd.f32 0.0, %v1557
        %v1559 = vpop.f32.mrb[0].mxu0
        %v1560 = vadd.f32 0.0, %v1559
        %v1561 = vpop.f32.mrb[0].mxu0
        %v1562 = vadd.f32 0.0, %v1561
        %v1563 = vpop.f32.mrb[0].mxu0
        %v1564 = vadd.f32 0.0, %v1563
        %1565 = vmatprep.mubr.bf16.mxu0 %v1508
        %1566 = vmatmul.mubr.bf16.gmra.mrb[0].mxu0 %v1492
        %v1567 = vpop.f32.mrb[0].mxu0
        %v1568 = vadd.f32 0.0, %v1567
        %v1569 = vpop.f32.mrb[0].mxu0
        %v1570 = vadd.f32 0.0, %v1569
        %v1571 = vpop.f32.mrb[0].mxu0
        %v1572 = vadd.f32 0.0, %v1571
        %v1573 = vpop.f32.mrb[0].mxu0
        %v1574 = vadd.f32 0.0, %v1573
        %1575 = vmatprep.mubr.bf16.mxu0 %v1511
        %1576 = vmatmul.mubr.bf16.gmra.mrb[0].mxu0 %v1494
        %v1577 = vpop.f32.mrb[0].mxu0
        %v1578 = vadd.f32 0.0, %v1577
        %v1579 = vpop.f32.mrb[0].mxu0
        %v1580 = vadd.f32 0.0, %v1579
        %v1581 = vpop.f32.mrb[0].mxu0
        %v1582 = vadd.f32 0.0, %v1581
        %v1583 = vpop.f32.mrb[0].mxu0
        %v1584 = vadd.f32 0.0, %v1583
        %1585 = vdwg.mxu0
        %1586 = vmatprep.subr.bf16.mxu0 %v1218
        %1587 = vmatpush1.bf16.msra.mxu0 %v1217
        %1588 = vmatprep.subr.bf16.mxu0 %v1223
        %1589 = vmatpush1.bf16.msra.mxu0 %v1222
        %1590 = vmatprep.subr.bf16.mxu0 %v1258
        %1591 = vmatpush1.bf16.msra.mxu0 %v1257
        %1592 = vmatprep.subr.bf16.mxu0 %v1262
        %1593 = vmatpush1.bf16.msra.mxu0 %v1261
        %1594 = vmatprep.subr.bf16.mxu0 %v1295
        %1595 = vmatpush1.bf16.msra.mxu0 %v1294
        %1596 = vmatprep.subr.bf16.mxu0 %v1299
        %1597 = vmatpush1.bf16.msra.mxu0 %v1298
        %1598 = vmatprep.subr.bf16.mxu0 %v1332
        %1599 = vmatpush1.bf16.msra.mxu0 %v1331
        %1600 = vmatprep.subr.bf16.mxu0 %v1336
        %1601 = vmatpush1.bf16.msra.mxu0 %v1335
        %1602 = vmatprep.subr.bf16.mxu0 %v1369
        %1603 = vmatpush1.bf16.msra.mxu0 %v1368
        %1604 = vmatprep.subr.bf16.mxu0 %v1373
        %1605 = vmatpush1.bf16.msra.mxu0 %v1372
        %1606 = vmatprep.subr.bf16.mxu0 %v1406
        %1607 = vmatpush1.bf16.msra.mxu0 %v1405
        %1608 = vmatprep.subr.bf16.mxu0 %v1410
        %1609 = vmatpush1.bf16.msra.mxu0 %v1409
        %1610 = vmatprep.subr.bf16.mxu0 %v1443
        %1611 = vmatpush1.bf16.msra.mxu0 %v1442
        %1612 = vmatprep.subr.bf16.mxu0 %v1447
        %1613 = vmatpush1.bf16.msra.mxu0 %v1446
        %1614 = vmatprep.subr.bf16.mxu0 0
        %1615 = vmatpush1.bf16.msra.mxu0 0
        %1616 = vmatprep.subr.bf16.mxu0 0
        %1617 = vmatpush1.bf16.msra.mxu0 0
        %1618 = vmatprep.mubr.bf16.mxu0 %v1502
        %1619 = vmatmul.mubr.bf16.gmra.mrb[0].mxu0 %v1488
        %v1620 = vpop.f32.mrb[0].mxu0
        %v1621 = vadd.f32 0.0, %v1620
        %v1622 = vpop.f32.mrb[0].mxu0
        %v1623 = vadd.f32 0.0, %v1622
        %v1624 = vpop.f32.mrb[0].mxu0
        %v1625 = vadd.f32 0.0, %v1624
        %v1626 = vpop.f32.mrb[0].mxu0
        %v1627 = vadd.f32 0.0, %v1626
        %1628 = vmatprep.mubr.bf16.mxu0 %v1505
        %1629 = vmatmul.mubr.bf16.gmra.mrb[0].mxu0 %v1490
        %v1630 = vpop.f32.mrb[0].mxu0
        %v1631 = vadd.f32 0.0, %v1630
        %v1632 = vpop.f32.mrb[0].mxu0
        %v1633 = vadd.f32 0.0, %v1632
        %v1634 = vpop.f32.mrb[0].mxu0
        %v1635 = vadd.f32 0.0, %v1634
        %v1636 = vpop.f32.mrb[0].mxu0
        %v1637 = vadd.f32 0.0, %v1636
        %1638 = vmatprep.mubr.bf16.mxu0 %v1508
        %1639 = vmatmul.mubr.bf16.gmra.mrb[0].mxu0 %v1492
        %v1640 = vpop.f32.mrb[0].mxu0
        %v1641 = vadd.f32 0.0, %v1640
        %v1642 = vpop.f32.mrb[0].mxu0
        %v1643 = vadd.f32 0.0, %v1642
        %v1644 = vpop.f32.mrb[0].mxu0
        %v1645 = vadd.f32 0.0, %v1644
        %v1646 = vpop.f32.mrb[0].mxu0
        %v1647 = vadd.f32 0.0, %v1646
        %1648 = vmatprep.mubr.bf16.mxu0 %v1511
        %1649 = vmatmul.mubr.bf16.gmra.mrb[0].mxu0 %v1494
        %v1650 = vpop.f32.mrb[0].mxu0
        %v1651 = vadd.f32 0.0, %v1650
        %v1652 = vpop.f32.mrb[0].mxu0
        %v1653 = vadd.f32 0.0, %v1652
        %v1654 = vpop.f32.mrb[0].mxu0
        %v1655 = vadd.f32 0.0, %v1654
        %v1656 = vpop.f32.mrb[0].mxu0
        %v1657 = vadd.f32 0.0, %v1656
        %1658 = vdwg.mxu0
        %v1659 = vld [vmem:[%s6] sm:$0xff]
        %v1660 = vld [vmem:[%s6 + $0x8] sm:$0xff]
        %v1661 = vld [vmem:[%s6 + $0x10] sm:$0xff]
        %v1662 = vld [vmem:[%s6 + $0x18] sm:$0xff]
        %v1663 = vld [vmem:[%s6 + $0x20] sm:$0xff]
        %v1664 = vld [vmem:[%s6 + $0x28] sm:$0xff]
        %v1665 = vld [vmem:[%s6 + $0x30] sm:$0xff]
        %v1666 = vld [vmem:[%s6 + $0x38] sm:$0xff]
        %1668 = vset.pattern.permute.xlu0 0
        %1669 = vperm.xlu0 %1668, %v1659
        %v1670 = vpop.permute.xlu0 %1669
        %1673 = vset.pattern.permute.xlu0 0
        %1674 = vperm.xlu0 %1673, %v1660
        %v1675 = vpop.permute.xlu0 %1674
        %1678 = vset.pattern.permute.xlu0 0
        %1679 = vperm.xlu0 %1678, %v1661
        %v1680 = vpop.permute.xlu0 %1679
        %1683 = vset.pattern.permute.xlu0 0
        %1684 = vperm.xlu0 %1683, %v1662
        %v1685 = vpop.permute.xlu0 %1684
        %1688 = vset.pattern.permute.xlu0 0
        %1689 = vperm.xlu0 %1688, %v1663
        %v1690 = vpop.permute.xlu0 %1689
        %1693 = vset.pattern.permute.xlu0 0
        %1694 = vperm.xlu0 %1693, %v1664
        %v1695 = vpop.permute.xlu0 %1694
        %1698 = vset.pattern.permute.xlu0 0
        %1699 = vperm.xlu0 %1698, %v1665
        %v1700 = vpop.permute.xlu0 %1699
        %1703 = vset.pattern.permute.xlu0 0
        %1704 = vperm.xlu0 %1703, %v1666
        %v1705 = vpop.permute.xlu0 %1704
        %v1707 = vmul.f32 %v1548, %v1670
        %v1708 = vmul.f32 %v1550, %v1670
        %v1709 = vmul.f32 %v1621, %v1670
        %v1710 = vmul.f32 %v1623, %v1670
        %v1711 = vmul.f32 %v1552, %v1675
        %v1712 = vmul.f32 %v1554, %v1675
        %v1713 = vmul.f32 %v1625, %v1675
        %v1714 = vmul.f32 %v1627, %v1675
        %v1715 = vmul.f32 %v1558, %v1680
        %v1716 = vmul.f32 %v1560, %v1680
        %v1717 = vmul.f32 %v1631, %v1680
        %v1718 = vmul.f32 %v1633, %v1680
        %v1719 = vmul.f32 %v1562, %v1685
        %v1720 = vmul.f32 %v1564, %v1685
        %v1721 = vmul.f32 %v1635, %v1685
        %v1722 = vmul.f32 %v1637, %v1685
        %v1723 = vmul.f32 %v1568, %v1690
        %v1724 = vmul.f32 %v1570, %v1690
        %v1725 = vmul.f32 %v1641, %v1690
        %v1726 = vmul.f32 %v1643, %v1690
        %v1727 = vmul.f32 %v1572, %v1695
        %v1728 = vmul.f32 %v1574, %v1695
        %v1729 = vmul.f32 %v1645, %v1695
        %v1730 = vmul.f32 %v1647, %v1695
        %v1731 = vmul.f32 %v1578, %v1700
        %v1732 = vmul.f32 %v1580, %v1700
        %v1733 = vmul.f32 %v1651, %v1700
        %v1734 = vmul.f32 %v1653, %v1700
        %v1735 = vmul.f32 %v1582, %v1705
        %v1736 = vmul.f32 %v1584, %v1705
        %v1737 = vmul.f32 %v1655, %v1705
        %v1738 = vmul.f32 %v1657, %v1705
        %1739 = vset.pattern.permute.xlu0 1
        %1740 = vperm.xlu0 %1739, %v1659
        %v1741 = vpop.permute.xlu0 %1740
        %1743 = vset.pattern.permute.xlu0 1
        %1744 = vperm.xlu0 %1743, %v1660
        %v1745 = vpop.permute.xlu0 %1744
        %1747 = vset.pattern.permute.xlu0 1
        %1748 = vperm.xlu0 %1747, %v1661
        %v1749 = vpop.permute.xlu0 %1748
        %1751 = vset.pattern.permute.xlu0 1
        %1752 = vperm.xlu0 %1751, %v1662
        %v1753 = vpop.permute.xlu0 %1752
        %1755 = vset.pattern.permute.xlu0 1
        %1756 = vperm.xlu0 %1755, %v1663
        %v1757 = vpop.permute.xlu0 %1756
        %1759 = vset.pattern.permute.xlu0 1
        %1760 = vperm.xlu0 %1759, %v1664
        %v1761 = vpop.permute.xlu0 %1760
        %1763 = vset.pattern.permute.xlu0 1
        %1764 = vperm.xlu0 %1763, %v1665
        %v1765 = vpop.permute.xlu0 %1764
        %1767 = vset.pattern.permute.xlu0 1
        %1768 = vperm.xlu0 %1767, %v1666
        %v1769 = vpop.permute.xlu0 %1768
        %v1771 = vadd.f32 %v1707, %v1741
        %v1772 = vadd.f32 %v1708, %v1741
        %v1773 = vadd.f32 %v1709, %v1741
        %v1774 = vadd.f32 %v1710, %v1741
        %v1775 = vadd.f32 %v1711, %v1745
        %v1776 = vadd.f32 %v1712, %v1745
        %v1777 = vadd.f32 %v1713, %v1745
        %v1778 = vadd.f32 %v1714, %v1745
        %v1779 = vadd.f32 %v1715, %v1749
        %v1780 = vadd.f32 %v1716, %v1749
        %v1781 = vadd.f32 %v1717, %v1749
        %v1782 = vadd.f32 %v1718, %v1749
        %v1783 = vadd.f32 %v1719, %v1753
        %v1784 = vadd.f32 %v1720, %v1753
        %v1785 = vadd.f32 %v1721, %v1753
        %v1786 = vadd.f32 %v1722, %v1753
        %v1787 = vadd.f32 %v1723, %v1757
        %v1788 = vadd.f32 %v1724, %v1757
        %v1789 = vadd.f32 %v1725, %v1757
        %v1790 = vadd.f32 %v1726, %v1757
        %v1791 = vadd.f32 %v1727, %v1761
        %v1792 = vadd.f32 %v1728, %v1761
        %v1793 = vadd.f32 %v1729, %v1761
        %v1794 = vadd.f32 %v1730, %v1761
        %v1795 = vadd.f32 %v1731, %v1765
        %v1796 = vadd.f32 %v1732, %v1765
        %v1797 = vadd.f32 %v1733, %v1765
        %v1798 = vadd.f32 %v1734, %v1765
        %v1799 = vadd.f32 %v1735, %v1769
        %v1800 = vadd.f32 %v1736, %v1769
        %v1801 = vadd.f32 %v1737, %v1769
        %v1802 = vadd.f32 %v1738, %v1769
        %v1803 = vmul.f32 %v1771, 0.5
        %v1804 = vmul.f32 %v1772, 0.5
        %v1805 = vmul.f32 %v1773, 0.5
        %v1806 = vmul.f32 %v1774, 0.5
        %v1807 = vmul.f32 %v1775, 0.5
        %v1808 = vmul.f32 %v1776, 0.5
        %v1809 = vmul.f32 %v1777, 0.5
        %v1810 = vmul.f32 %v1778, 0.5
        %v1811 = vmul.f32 %v1779, 0.5
        %v1812 = vmul.f32 %v1780, 0.5
        %v1813 = vmul.f32 %v1781, 0.5
        %v1814 = vmul.f32 %v1782, 0.5
        %v1815 = vmul.f32 %v1783, 0.5
        %v1816 = vmul.f32 %v1784, 0.5
        %v1817 = vmul.f32 %v1785, 0.5
        %v1818 = vmul.f32 %v1786, 0.5
        %v1819 = vmul.f32 %v1787, 0.5
        %v1820 = vmul.f32 %v1788, 0.5
        %v1821 = vmul.f32 %v1789, 0.5
        %v1822 = vmul.f32 %v1790, 0.5
        %v1823 = vmul.f32 %v1791, 0.5
        %v1824 = vmul.f32 %v1792, 0.5
        %v1825 = vmul.f32 %v1793, 0.5
        %v1826 = vmul.f32 %v1794, 0.5
        %v1827 = vmul.f32 %v1795, 0.5
        %v1828 = vmul.f32 %v1796, 0.5
        %v1829 = vmul.f32 %v1797, 0.5
        %v1830 = vmul.f32 %v1798, 0.5
        %v1831 = vmul.f32 %v1799, 0.5
        %v1832 = vmul.f32 %v1800, 0.5
        %v1833 = vmul.f32 %v1801, 0.5
        %v1834 = vmul.f32 %v1802, 0.5
        %v1835 = vmul.f32 %v1771, 0.70710677
        %v1836 = vmul.f32 %v1772, 0.70710677
        %v1837 = vmul.f32 %v1773, 0.70710677
        %v1838 = vmul.f32 %v1774, 0.70710677
        %v1839 = vmul.f32 %v1775, 0.70710677
        %v1840 = vmul.f32 %v1776, 0.70710677
        %v1841 = vmul.f32 %v1777, 0.70710677
        %v1842 = vmul.f32 %v1778, 0.70710677
        %v1843 = vmul.f32 %v1779, 0.70710677
        %v1844 = vmul.f32 %v1780, 0.70710677
        %v1845 = vmul.f32 %v1781, 0.70710677
        %v1846 = vmul.f32 %v1782, 0.70710677
        %v1847 = vmul.f32 %v1783, 0.70710677
        %v1848 = vmul.f32 %v1784, 0.70710677
        %v1849 = vmul.f32 %v1785, 0.70710677
        %v1850 = vmul.f32 %v1786, 0.70710677
        %v1851 = vmul.f32 %v1787, 0.70710677
        %v1852 = vmul.f32 %v1788, 0.70710677
        %v1853 = vmul.f32 %v1789, 0.70710677
        %v1854 = vmul.f32 %v1790, 0.70710677
        %v1855 = vmul.f32 %v1791, 0.70710677
        %v1856 = vmul.f32 %v1792, 0.70710677
        %v1857 = vmul.f32 %v1793, 0.70710677
        %v1858 = vmul.f32 %v1794, 0.70710677
        %v1859 = vmul.f32 %v1795, 0.70710677
        %v1860 = vmul.f32 %v1796, 0.70710677
        %v1861 = vmul.f32 %v1797, 0.70710677
        %v1862 = vmul.f32 %v1798, 0.70710677
        %v1863 = vmul.f32 %v1799, 0.70710677
        %v1864 = vmul.f32 %v1800, 0.70710677
        %v1865 = vmul.f32 %v1801, 0.70710677
        %v1866 = vmul.f32 %v1802, 0.70710677
        %v1867 = verf.f32.pop %v1835
        %v1868 = verf.f32.pop %v1836
        %v1869 = verf.f32.pop %v1837
        %v1870 = verf.f32.pop %v1838
        %v1871 = verf.f32.pop %v1839
        %v1872 = verf.f32.pop %v1840
        %v1873 = verf.f32.pop %v1841
        %v1874 = verf.f32.pop %v1842
        %v1875 = verf.f32.pop %v1843
        %v1876 = verf.f32.pop %v1844
        %v1877 = verf.f32.pop %v1845
        %v1878 = verf.f32.pop %v1846
        %v1879 = verf.f32.pop %v1847
        %v1880 = verf.f32.pop %v1848
        %v1881 = verf.f32.pop %v1849
        %v1882 = verf.f32.pop %v1850
        %v1883 = verf.f32.pop %v1851
        %v1884 = verf.f32.pop %v1852
        %v1885 = verf.f32.pop %v1853
        %v1886 = verf.f32.pop %v1854
        %v1887 = verf.f32.pop %v1855
        %v1888 = verf.f32.pop %v1856
        %v1889 = verf.f32.pop %v1857
        %v1890 = verf.f32.pop %v1858
        %v1891 = verf.f32.pop %v1859
        %v1892 = verf.f32.pop %v1860
        %v1893 = verf.f32.pop %v1861
        %v1894 = verf.f32.pop %v1862
        %v1895 = verf.f32.pop %v1863
        %v1896 = verf.f32.pop %v1864
        %v1897 = verf.f32.pop %v1865
        %v1898 = verf.f32.pop %v1866
        %v1899 = vadd.f32 %v1867, 1.0
        %v1900 = vadd.f32 %v1868, 1.0
        %v1901 = vadd.f32 %v1869, 1.0
        %v1902 = vadd.f32 %v1870, 1.0
        %v1903 = vadd.f32 %v1871, 1.0
        %v1904 = vadd.f32 %v1872, 1.0
        %v1905 = vadd.f32 %v1873, 1.0
        %v1906 = vadd.f32 %v1874, 1.0
        %v1907 = vadd.f32 %v1875, 1.0
        %v1908 = vadd.f32 %v1876, 1.0
        %v1909 = vadd.f32 %v1877, 1.0
        %v1910 = vadd.f32 %v1878, 1.0
        %v1911 = vadd.f32 %v1879, 1.0
        %v1912 = vadd.f32 %v1880, 1.0
        %v1913 = vadd.f32 %v1881, 1.0
        %v1914 = vadd.f32 %v1882, 1.0
        %v1915 = vadd.f32 %v1883, 1.0
        %v1916 = vadd.f32 %v1884, 1.0
        %v1917 = vadd.f32 %v1885, 1.0
        %v1918 = vadd.f32 %v1886, 1.0
        %v1919 = vadd.f32 %v1887, 1.0
        %v1920 = vadd.f32 %v1888, 1.0
        %v1921 = vadd.f32 %v1889, 1.0
        %v1922 = vadd.f32 %v1890, 1.0
        %v1923 = vadd.f32 %v1891, 1.0
        %v1924 = vadd.f32 %v1892, 1.0
        %v1925 = vadd.f32 %v1893, 1.0
        %v1926 = vadd.f32 %v1894, 1.0
        %v1927 = vadd.f32 %v1895, 1.0
        %v1928 = vadd.f32 %v1896, 1.0
        %v1929 = vadd.f32 %v1897, 1.0
        %v1930 = vadd.f32 %v1898, 1.0
        %v1931 = vmul.f32 %v1803, %v1899
        %v1932 = vmul.f32 %v1804, %v1900
        %v1933 = vmul.f32 %v1805, %v1901
        %v1934 = vmul.f32 %v1806, %v1902
        %v1935 = vmul.f32 %v1807, %v1903
        %v1936 = vmul.f32 %v1808, %v1904
        %v1937 = vmul.f32 %v1809, %v1905
        %v1938 = vmul.f32 %v1810, %v1906
        %v1939 = vmul.f32 %v1811, %v1907
        %v1940 = vmul.f32 %v1812, %v1908
        %v1941 = vmul.f32 %v1813, %v1909
        %v1942 = vmul.f32 %v1814, %v1910
        %v1943 = vmul.f32 %v1815, %v1911
        %v1944 = vmul.f32 %v1816, %v1912
        %v1945 = vmul.f32 %v1817, %v1913
        %v1946 = vmul.f32 %v1818, %v1914
        %v1947 = vmul.f32 %v1819, %v1915
        %v1948 = vmul.f32 %v1820, %v1916
        %v1949 = vmul.f32 %v1821, %v1917
        %v1950 = vmul.f32 %v1822, %v1918
        %v1951 = vmul.f32 %v1823, %v1919
        %v1952 = vmul.f32 %v1824, %v1920
        %v1953 = vmul.f32 %v1825, %v1921
        %v1954 = vmul.f32 %v1826, %v1922
        %v1955 = vmul.f32 %v1827, %v1923
        %v1956 = vmul.f32 %v1828, %v1924
        %v1957 = vmul.f32 %v1829, %v1925
        %v1958 = vmul.f32 %v1830, %v1926
        %v1959 = vmul.f32 %v1831, %v1927
        %v1960 = vmul.f32 %v1832, %v1928
        %v1961 = vmul.f32 %v1833, %v1929
        %v1962 = vmul.f32 %v1834, %v1930
        %v1963 = vpack.c.bf16 %v1935, %v1931
        %v1964 = vpack.c.bf16 %v1936, %v1932
        %v1965 = vpack.c.bf16 %v1937, %v1933
        %v1966 = vpack.c.bf16 %v1938, %v1934
        %v1967 = vpack.c.bf16 %v1943, %v1939
        %v1968 = vpack.c.bf16 %v1944, %v1940
        %v1969 = vpack.c.bf16 %v1945, %v1941
        %v1970 = vpack.c.bf16 %v1946, %v1942
        %v1971 = vpack.c.bf16 %v1951, %v1947
        %v1972 = vpack.c.bf16 %v1952, %v1948
        %v1973 = vpack.c.bf16 %v1953, %v1949
        %v1974 = vpack.c.bf16 %v1954, %v1950
        %v1975 = vpack.c.bf16 %v1959, %v1955
        %v1976 = vpack.c.bf16 %v1960, %v1956
        %v1977 = vpack.c.bf16 %v1961, %v1957
        %v1978 = vpack.c.bf16 %v1962, %v1958
        %1987 = vrot.lane.b32.xlu0 %v1963, 64
        %v1988 = vpop.permute.xlu0 %1987
        %1989 = vrot.lane.b32.xlu0 %v1964, 64
        %v1990 = vpop.permute.xlu0 %1989
        %1991 = vrot.lane.b32.xlu0 %v1967, 64
        %v1992 = vpop.permute.xlu0 %1991
        %1993 = vrot.lane.b32.xlu0 %v1968, 64
        %v1994 = vpop.permute.xlu0 %1993
        %1995 = vrot.lane.b32.xlu0 %v1971, 64
        %v1996 = vpop.permute.xlu0 %1995
        %1997 = vrot.lane.b32.xlu0 %v1972, 64
        %v1998 = vpop.permute.xlu0 %1997
        %1999 = vrot.lane.b32.xlu0 %v1975, 64
        %v2000 = vpop.permute.xlu0 %1999
        %2001 = vrot.lane.b32.xlu0 %v1976, 64
        %v2002 = vpop.permute.xlu0 %2001
        %v2003 = vsel %vm1365, %v1988, %v1990
        %v2004 = vsel %vm1365, %v1992, %v1994
        %v2005 = vsel %vm1365, %v1996, %v1998
        %v2006 = vsel %vm1365, %v2000, %v2002
        %2015 = vrot.lane.b32.xlu0 %v1965, 64
        %v2016 = vpop.permute.xlu0 %2015
        %2017 = vrot.lane.b32.xlu0 %v1969, 64
        %v2018 = vpop.permute.xlu0 %2017
        %2019 = vrot.lane.b32.xlu0 %v1973, 64
        %v2020 = vpop.permute.xlu0 %2019
        %2021 = vrot.lane.b32.xlu0 %v1977, 64
        %v2022 = vpop.permute.xlu0 %2021
        %v2023 = vsel %vm1365, %v1990, %v2016
        %v2024 = vsel %vm1365, %v1994, %v2018
        %v2025 = vsel %vm1365, %v1998, %v2020
        %v2026 = vsel %vm1365, %v2002, %v2022
        %2035 = vrot.lane.b32.xlu0 %v1966, 64
        %v2036 = vpop.permute.xlu0 %2035
        %2037 = vrot.lane.b32.xlu0 %v1970, 64
        %v2038 = vpop.permute.xlu0 %2037
        %2039 = vrot.lane.b32.xlu0 %v1974, 64
        %v2040 = vpop.permute.xlu0 %2039
        %2041 = vrot.lane.b32.xlu0 %v1978, 64
        %v2042 = vpop.permute.xlu0 %2041
        %v2043 = vsel %vm1365, %v2016, %v2036
        %v2044 = vsel %vm1365, %v2018, %v2038
        %v2045 = vsel %vm1365, %v2020, %v2040
        %v2046 = vsel %vm1365, %v2022, %v2042
        %v2051 = vld [vmem:[%s7] sm:$0xff]
        %v2052 = vld [vmem:[%s7 + $0x8] sm:$0xff]
        %v2053 = vld [vmem:[%s7 + $0x10] sm:$0xff]
        %v2054 = vld [vmem:[%s7 + $0x18] sm:$0xff]
        %v2055 = vld [vmem:[%s7 + $0x20] sm:$0xff]
        %v2056 = vld [vmem:[%s7 + $0x28] sm:$0xff]
        %v2057 = vld [vmem:[%s7 + $0x30] sm:$0xff]
        %v2058 = vld [vmem:[%s7 + $0x38] sm:$0xff]
        %v2059 = vld [vmem:[%s7 + $0x40] sm:$0xff]
        %v2060 = vld [vmem:[%s7 + $0x48] sm:$0xff]
        %v2061 = vld [vmem:[%s7 + $0x50] sm:$0xff]
        %v2062 = vld [vmem:[%s7 + $0x58] sm:$0xff]
        %v2063 = vld [vmem:[%s7 + $0x60] sm:$0xff]
        %v2064 = vld [vmem:[%s7 + $0x68] sm:$0xff]
        %v2065 = vld [vmem:[%s7 + $0x70] sm:$0xff]
        %v2066 = vld [vmem:[%s7 + $0x78] sm:$0xff]
        %v2067 = vld [vmem:[%s7 + $0x80] sm:$0xff]
        %v2068 = vld [vmem:[%s7 + $0x88] sm:$0xff]
        %v2069 = vld [vmem:[%s7 + $0x90] sm:$0xff]
        %v2070 = vld [vmem:[%s7 + $0x98] sm:$0xff]
        %v2071 = vld [vmem:[%s7 + $0xa0] sm:$0xff]
        %v2072 = vld [vmem:[%s7 + $0xa8] sm:$0xff]
        %v2073 = vld [vmem:[%s7 + $0xb0] sm:$0xff]
        %v2074 = vld [vmem:[%s7 + $0xb8] sm:$0xff]
        %v2075 = vld [vmem:[%s7 + $0xc0] sm:$0xff]
        %v2076 = vld [vmem:[%s7 + $0xc8] sm:$0xff]
        %v2077 = vld [vmem:[%s7 + $0xd0] sm:$0xff]
        %v2078 = vld [vmem:[%s7 + $0xd8] sm:$0xff]
        %v2079 = vld [vmem:[%s7 + $0xe0] sm:$0xff]
        %v2080 = vld [vmem:[%s7 + $0xe8] sm:$0xff]
        %v2081 = vld [vmem:[%s7 + $0xf0] sm:$0xff]
        %v2082 = vld [vmem:[%s7 + $0xf8] sm:$0xff]
        %v2115 = vunpack.c.l.b16 %v2051
        %v2116 = vunpack.c.h.b16 %v2051
        %v2117 = vunpack.c.l.b16 %v2052
        %v2118 = vunpack.c.h.b16 %v2052
        %v2119 = vunpack.c.l.b16 %v2053
        %v2120 = vunpack.c.h.b16 %v2053
        %v2121 = vunpack.c.l.b16 %v2054
        %v2122 = vunpack.c.h.b16 %v2054
        %v2123 = vunpack.c.l.b16 %v2055
        %v2124 = vunpack.c.h.b16 %v2055
        %v2125 = vunpack.c.l.b16 %v2056
        %v2126 = vunpack.c.h.b16 %v2056
        %v2127 = vunpack.c.l.b16 %v2057
        %v2128 = vunpack.c.h.b16 %v2057
        %v2129 = vunpack.c.l.b16 %v2058
        %v2130 = vunpack.c.h.b16 %v2058
        %v2131 = vunpack.c.l.b16 %v2059
        %v2132 = vunpack.c.h.b16 %v2059
        %v2133 = vunpack.c.l.b16 %v2060
        %v2134 = vunpack.c.h.b16 %v2060
        %v2135 = vunpack.c.l.b16 %v2061
        %v2136 = vunpack.c.h.b16 %v2061
        %v2137 = vunpack.c.l.b16 %v2062
        %v2138 = vunpack.c.h.b16 %v2062
        %v2139 = vunpack.c.l.b16 %v2063
        %v2140 = vunpack.c.h.b16 %v2063
        %v2141 = vunpack.c.l.b16 %v2064
        %v2142 = vunpack.c.h.b16 %v2064
        %v2143 = vunpack.c.l.b16 %v2065
        %v2144 = vunpack.c.h.b16 %v2065
        %v2145 = vunpack.c.l.b16 %v2066
        %v2146 = vunpack.c.h.b16 %v2066
        %v2147 = vunpack.c.l.b16 %v2067
        %v2148 = vunpack.c.h.b16 %v2067
        %v2149 = vunpack.c.l.b16 %v2068
        %v2150 = vunpack.c.h.b16 %v2068
        %v2151 = vunpack.c.l.b16 %v2069
        %v2152 = vunpack.c.h.b16 %v2069
        %v2153 = vunpack.c.l.b16 %v2070
        %v2154 = vunpack.c.h.b16 %v2070
        %v2155 = vunpack.c.l.b16 %v2071
        %v2156 = vunpack.c.h.b16 %v2071
        %v2157 = vunpack.c.l.b16 %v2072
        %v2158 = vunpack.c.h.b16 %v2072
        %v2159 = vunpack.c.l.b16 %v2073
        %v2160 = vunpack.c.h.b16 %v2073
        %v2161 = vunpack.c.l.b16 %v2074
        %v2162 = vunpack.c.h.b16 %v2074
        %v2163 = vunpack.c.l.b16 %v2075
        %v2164 = vunpack.c.h.b16 %v2075
        %v2165 = vunpack.c.l.b16 %v2076
        %v2166 = vunpack.c.h.b16 %v2076
        %v2167 = vunpack.c.l.b16 %v2077
        %v2168 = vunpack.c.h.b16 %v2077
        %v2169 = vunpack.c.l.b16 %v2078
        %v2170 = vunpack.c.h.b16 %v2078
        %v2171 = vunpack.c.l.b16 %v2079
        %v2172 = vunpack.c.h.b16 %v2079
        %v2173 = vunpack.c.l.b16 %v2080
        %v2174 = vunpack.c.h.b16 %v2080
        %v2175 = vunpack.c.l.b16 %v2081
        %v2176 = vunpack.c.h.b16 %v2081
        %v2177 = vunpack.c.l.b16 %v2082
        %v2178 = vunpack.c.h.b16 %v2082
        %v2179 = vpack.c.b16 %v2119, %v2115
        %v2180 = vpack.c.b16 %v2120, %v2116
        %v2181 = vpack.c.b16 %v2121, %v2117
        %v2182 = vpack.c.b16 %v2122, %v2118
        %v2183 = vpack.c.b16 %v2127, %v2123
        %v2184 = vpack.c.b16 %v2128, %v2124
        %v2185 = vpack.c.b16 %v2129, %v2125
        %v2186 = vpack.c.b16 %v2130, %v2126
        %v2187 = vpack.c.b16 %v2135, %v2131
        %v2188 = vpack.c.b16 %v2136, %v2132
        %v2189 = vpack.c.b16 %v2137, %v2133
        %v2190 = vpack.c.b16 %v2138, %v2134
        %v2191 = vpack.c.b16 %v2143, %v2139
        %v2192 = vpack.c.b16 %v2144, %v2140
        %v2193 = vpack.c.b16 %v2145, %v2141
        %v2194 = vpack.c.b16 %v2146, %v2142
        %v2195 = vpack.c.b16 %v2151, %v2147
        %v2196 = vpack.c.b16 %v2152, %v2148
        %v2197 = vpack.c.b16 %v2153, %v2149
        %v2198 = vpack.c.b16 %v2154, %v2150
        %v2199 = vpack.c.b16 %v2159, %v2155
        %v2200 = vpack.c.b16 %v2160, %v2156
        %v2201 = vpack.c.b16 %v2161, %v2157
        %v2202 = vpack.c.b16 %v2162, %v2158
        %v2203 = vpack.c.b16 %v2167, %v2163
        %v2204 = vpack.c.b16 %v2168, %v2164
        %v2205 = vpack.c.b16 %v2169, %v2165
        %v2206 = vpack.c.b16 %v2170, %v2166
        %v2207 = vpack.c.b16 %v2175, %v2171
        %v2208 = vpack.c.b16 %v2176, %v2172
        %v2209 = vpack.c.b16 %v2177, %v2173
        %v2210 = vpack.c.b16 %v2178, %v2174
        %vm2235 = vcmask 523264
        %v2237 = vsel %vm2235, %v2182, 0
        %v2240 = vsel %vm2235, %v2186, 0
        %v2243 = vsel %vm2235, %v2190, 0
        %v2246 = vsel %vm2235, %v2194, 0
        %v2249 = vsel %vm2235, %v2198, 0
        %v2252 = vsel %vm2235, %v2202, 0
        %v2255 = vsel %vm2235, %v2206, 0
        %v2258 = vsel %vm2235, %v2210, 0
        %2260 = vmatprep.subr.bf16.mxu0 0
        %2261 = vmatpush1.bf16.msra.mxu0 %v1963
        %2262 = vmatprep.subr.bf16.mxu0 0
        %2263 = vmatpush1.bf16.msra.mxu0 %v1967
        %2264 = vmatprep.subr.bf16.mxu0 0
        %2265 = vmatpush1.bf16.msra.mxu0 %v1971
        %2266 = vmatprep.subr.bf16.mxu0 0
        %2267 = vmatpush1.bf16.msra.mxu0 %v1975
        %2268 = vmatprep.subr.bf16.mxu0 0
        %2269 = vmatpush1.bf16.msra.mxu0 %v2003
        %2270 = vmatprep.subr.bf16.mxu0 0
        %2271 = vmatpush1.bf16.msra.mxu0 %v2004
        %2272 = vmatprep.subr.bf16.mxu0 0
        %2273 = vmatpush1.bf16.msra.mxu0 %v2005
        %2274 = vmatprep.subr.bf16.mxu0 0
        %2275 = vmatpush1.bf16.msra.mxu0 %v2006
        %2276 = vmatprep.subr.bf16.mxu0 0
        %2277 = vmatpush1.bf16.msra.mxu0 %v1964
        %2278 = vmatprep.subr.bf16.mxu0 0
        %2279 = vmatpush1.bf16.msra.mxu0 %v1968
        %2280 = vmatprep.subr.bf16.mxu0 0
        %2281 = vmatpush1.bf16.msra.mxu0 %v1972
        %2282 = vmatprep.subr.bf16.mxu0 0
        %2283 = vmatpush1.bf16.msra.mxu0 %v1976
        %2284 = vmatprep.subr.bf16.mxu0 0
        %2285 = vmatpush1.bf16.msra.mxu0 %v2023
        %2286 = vmatprep.subr.bf16.mxu0 0
        %2287 = vmatpush1.bf16.msra.mxu0 %v2024
        %2288 = vmatprep.subr.bf16.mxu0 0
        %2289 = vmatpush1.bf16.msra.mxu0 %v2025
        %2290 = vmatprep.subr.bf16.mxu0 0
        %2291 = vmatpush1.bf16.msra.mxu0 %v2026
        %2292 = vmatprep.mubr.bf16.mxu0 %v2180
        %2293 = vmatmul.mubr.bf16.gmra.mrb[0].mxu0 %v2179
        %v2294 = vpop.f32.mrb[0].mxu0
        %v2295 = vadd.f32 0.0, %v2294
        %v2296 = vpop.f32.mrb[0].mxu0
        %v2297 = vpop.f32.mrb[0].mxu0
        %v2298 = vadd.f32 0.0, %v2297
        %v2299 = vpop.f32.mrb[0].mxu0
        %2300 = vmatprep.mubr.bf16.mxu0 %v2184
        %2301 = vmatmul.mubr.bf16.gmra.mrb[0].mxu0 %v2183
        %v2302 = vpop.f32.mrb[0].mxu0
        %v2303 = vadd.f32 0.0, %v2302
        %v2304 = vpop.f32.mrb[0].mxu0
        %v2305 = vpop.f32.mrb[0].mxu0
        %v2306 = vadd.f32 0.0, %v2305
        %v2307 = vpop.f32.mrb[0].mxu0
        %2308 = vmatprep.mubr.bf16.mxu0 %v2188
        %2309 = vmatmul.mubr.bf16.gmra.mrb[0].mxu0 %v2187
        %v2310 = vpop.f32.mrb[0].mxu0
        %v2311 = vadd.f32 0.0, %v2310
        %v2312 = vpop.f32.mrb[0].mxu0
        %v2313 = vpop.f32.mrb[0].mxu0
        %v2314 = vadd.f32 0.0, %v2313
        %v2315 = vpop.f32.mrb[0].mxu0
        %2316 = vmatprep.mubr.bf16.mxu0 %v2192
        %2317 = vmatmul.mubr.bf16.gmra.mrb[0].mxu0 %v2191
        %v2318 = vpop.f32.mrb[0].mxu0
        %v2319 = vadd.f32 0.0, %v2318
        %v2320 = vpop.f32.mrb[0].mxu0
        %v2321 = vpop.f32.mrb[0].mxu0
        %v2322 = vadd.f32 0.0, %v2321
        %v2323 = vpop.f32.mrb[0].mxu0
        %2324 = vmatprep.mubr.bf16.mxu0 %v2196
        %2325 = vmatmul.mubr.bf16.gmra.mrb[0].mxu0 %v2195
        %v2326 = vpop.f32.mrb[0].mxu0
        %v2327 = vadd.f32 0.0, %v2326
        %v2328 = vpop.f32.mrb[0].mxu0
        %v2329 = vpop.f32.mrb[0].mxu0
        %v2330 = vadd.f32 0.0, %v2329
        %v2331 = vpop.f32.mrb[0].mxu0
        %2332 = vmatprep.mubr.bf16.mxu0 %v2200
        %2333 = vmatmul.mubr.bf16.gmra.mrb[0].mxu0 %v2199
        %v2334 = vpop.f32.mrb[0].mxu0
        %v2335 = vadd.f32 0.0, %v2334
        %v2336 = vpop.f32.mrb[0].mxu0
        %v2337 = vpop.f32.mrb[0].mxu0
        %v2338 = vadd.f32 0.0, %v2337
        %v2339 = vpop.f32.mrb[0].mxu0
        %2340 = vmatprep.mubr.bf16.mxu0 %v2204
        %2341 = vmatmul.mubr.bf16.gmra.mrb[0].mxu0 %v2203
        %v2342 = vpop.f32.mrb[0].mxu0
        %v2343 = vadd.f32 0.0, %v2342
        %v2344 = vpop.f32.mrb[0].mxu0
        %v2345 = vpop.f32.mrb[0].mxu0
        %v2346 = vadd.f32 0.0, %v2345
        %v2347 = vpop.f32.mrb[0].mxu0
        %2348 = vmatprep.mubr.bf16.mxu0 %v2208
        %2349 = vmatmul.mubr.bf16.gmra.mrb[0].mxu0 %v2207
        %v2350 = vpop.f32.mrb[0].mxu0
        %v2351 = vadd.f32 0.0, %v2350
        %v2352 = vpop.f32.mrb[0].mxu0
        %v2353 = vpop.f32.mrb[0].mxu0
        %v2354 = vadd.f32 0.0, %v2353
        %v2355 = vpop.f32.mrb[0].mxu0
        %2356 = vdwg.mxu0
        %2357 = vmatprep.subr.bf16.mxu0 0
        %2358 = vmatpush1.bf16.msra.mxu0 %v1965
        %2359 = vmatprep.subr.bf16.mxu0 0
        %2360 = vmatpush1.bf16.msra.mxu0 %v1969
        %2361 = vmatprep.subr.bf16.mxu0 0
        %2362 = vmatpush1.bf16.msra.mxu0 %v1973
        %2363 = vmatprep.subr.bf16.mxu0 0
        %2364 = vmatpush1.bf16.msra.mxu0 %v1977
        %2365 = vmatprep.subr.bf16.mxu0 0
        %2366 = vmatpush1.bf16.msra.mxu0 %v2043
        %2367 = vmatprep.subr.bf16.mxu0 0
        %2368 = vmatpush1.bf16.msra.mxu0 %v2044
        %2369 = vmatprep.subr.bf16.mxu0 0
        %2370 = vmatpush1.bf16.msra.mxu0 %v2045
        %2371 = vmatprep.subr.bf16.mxu0 0
        %2372 = vmatpush1.bf16.msra.mxu0 %v2046
        %2373 = vmatprep.subr.bf16.mxu0 0
        %2374 = vmatpush1.bf16.msra.mxu0 %v1966
        %2375 = vmatprep.subr.bf16.mxu0 0
        %2376 = vmatpush1.bf16.msra.mxu0 %v1970
        %2377 = vmatprep.subr.bf16.mxu0 0
        %2378 = vmatpush1.bf16.msra.mxu0 %v1974
        %2379 = vmatprep.subr.bf16.mxu0 0
        %2380 = vmatpush1.bf16.msra.mxu0 %v1978
        %2381 = vmatprep.subr.bf16.mxu0 0
        %2382 = vmatpush1.bf16.msra.mxu0 0
        %2383 = vmatprep.subr.bf16.mxu0 0
        %2384 = vmatpush1.bf16.msra.mxu0 0
        %2385 = vmatprep.subr.bf16.mxu0 0
        %2386 = vmatpush1.bf16.msra.mxu0 0
        %2387 = vmatprep.subr.bf16.mxu0 0
        %2388 = vmatpush1.bf16.msra.mxu0 0
        %2389 = vmatprep.mubr.bf16.mxu0 %v2237
        %2390 = vmatmul.mubr.bf16.gmra.mrb[0].mxu0 %v2181
        %v2391 = vpop.f32.mrb[0].mxu0
        %v2392 = vadd.f32 %v2295, %v2391
        %v2393 = vpop.f32.mrb[0].mxu0
        %v2394 = vpop.f32.mrb[0].mxu0
        %v2395 = vadd.f32 %v2298, %v2394
        %v2396 = vpop.f32.mrb[0].mxu0
        %2397 = vmatprep.mubr.bf16.mxu0 %v2240
        %2398 = vmatmul.mubr.bf16.gmra.mrb[0].mxu0 %v2185
        %v2399 = vpop.f32.mrb[0].mxu0
        %v2400 = vadd.f32 %v2303, %v2399
        %v2401 = vpop.f32.mrb[0].mxu0
        %v2402 = vpop.f32.mrb[0].mxu0
        %v2403 = vadd.f32 %v2306, %v2402
        %v2404 = vpop.f32.mrb[0].mxu0
        %2405 = vmatprep.mubr.bf16.mxu0 %v2243
        %2406 = vmatmul.mubr.bf16.gmra.mrb[0].mxu0 %v2189
        %v2407 = vpop.f32.mrb[0].mxu0
        %v2408 = vadd.f32 %v2311, %v2407
        %v2409 = vpop.f32.mrb[0].mxu0
        %v2410 = vpop.f32.mrb[0].mxu0
        %v2411 = vadd.f32 %v2314, %v2410
        %v2412 = vpop.f32.mrb[0].mxu0
        %2413 = vmatprep.mubr.bf16.mxu0 %v2246
        %2414 = vmatmul.mubr.bf16.gmra.mrb[0].mxu0 %v2193
        %v2415 = vpop.f32.mrb[0].mxu0
        %v2416 = vadd.f32 %v2319, %v2415
        %v2417 = vpop.f32.mrb[0].mxu0
        %v2418 = vpop.f32.mrb[0].mxu0
        %v2419 = vadd.f32 %v2322, %v2418
        %v2420 = vpop.f32.mrb[0].mxu0
        %2421 = vmatprep.mubr.bf16.mxu0 %v2249
        %2422 = vmatmul.mubr.bf16.gmra.mrb[0].mxu0 %v2197
        %v2423 = vpop.f32.mrb[0].mxu0
        %v2424 = vadd.f32 %v2327, %v2423
        %v2425 = vpop.f32.mrb[0].mxu0
        %v2426 = vpop.f32.mrb[0].mxu0
        %v2427 = vadd.f32 %v2330, %v2426
        %v2428 = vpop.f32.mrb[0].mxu0
        %2429 = vmatprep.mubr.bf16.mxu0 %v2252
        %2430 = vmatmul.mubr.bf16.gmra.mrb[0].mxu0 %v2201
        %v2431 = vpop.f32.mrb[0].mxu0
        %v2432 = vadd.f32 %v2335, %v2431
        %v2433 = vpop.f32.mrb[0].mxu0
        %v2434 = vpop.f32.mrb[0].mxu0
        %v2435 = vadd.f32 %v2338, %v2434
        %v2436 = vpop.f32.mrb[0].mxu0
        %2437 = vmatprep.mubr.bf16.mxu0 %v2255
        %2438 = vmatmul.mubr.bf16.gmra.mrb[0].mxu0 %v2205
        %v2439 = vpop.f32.mrb[0].mxu0
        %v2440 = vadd.f32 %v2343, %v2439
        %v2441 = vpop.f32.mrb[0].mxu0
        %v2442 = vpop.f32.mrb[0].mxu0
        %v2443 = vadd.f32 %v2346, %v2442
        %v2444 = vpop.f32.mrb[0].mxu0
        %2445 = vmatprep.mubr.bf16.mxu0 %v2258
        %2446 = vmatmul.mubr.bf16.gmra.mrb[0].mxu0 %v2209
        %v2447 = vpop.f32.mrb[0].mxu0
        %v2448 = vadd.f32 %v2351, %v2447
        %v2449 = vpop.f32.mrb[0].mxu0
        %v2450 = vpop.f32.mrb[0].mxu0
        %v2451 = vadd.f32 %v2354, %v2450
        %v2452 = vpop.f32.mrb[0].mxu0
        %2453 = vdwg.mxu0
        %v2454 = vld [vmem:[%s8] sm:$0xff]
        %v2455 = vld [vmem:[%s8 + $0x8] sm:$0xff]
        %v2456 = vld [vmem:[%s8 + $0x10] sm:$0xff]
        %v2457 = vld [vmem:[%s8 + $0x18] sm:$0xff]
        %v2458 = vld [vmem:[%s8 + $0x20] sm:$0xff]
        %v2459 = vld [vmem:[%s8 + $0x28] sm:$0xff]
        %v2460 = vld [vmem:[%s8 + $0x30] sm:$0xff]
        %v2461 = vld [vmem:[%s8 + $0x38] sm:$0xff]
        %v2462 = vld [vmem:[%s8 + $0x40] sm:$0xff]
        %v2463 = vld [vmem:[%s8 + $0x48] sm:$0xff]
        %v2464 = vld [vmem:[%s8 + $0x50] sm:$0xff]
        %v2465 = vld [vmem:[%s8 + $0x58] sm:$0xff]
        %v2466 = vld [vmem:[%s8 + $0x60] sm:$0xff]
        %v2467 = vld [vmem:[%s8 + $0x68] sm:$0xff]
        %v2468 = vld [vmem:[%s8 + $0x70] sm:$0xff]
        %v2469 = vld [vmem:[%s8 + $0x78] sm:$0xff]
        %2471 = vset.pattern.permute.xlu0 0
        %2472 = vperm.xlu0 %2471, %v2454
        %v2473 = vpop.permute.xlu0 %2472
        %2476 = vset.pattern.permute.xlu0 0
        %2477 = vperm.xlu0 %2476, %v2455
        %v2478 = vpop.permute.xlu0 %2477
        %2481 = vset.pattern.permute.xlu0 0
        %2482 = vperm.xlu0 %2481, %v2456
        %v2483 = vpop.permute.xlu0 %2482
        %2486 = vset.pattern.permute.xlu0 0
        %2487 = vperm.xlu0 %2486, %v2457
        %v2488 = vpop.permute.xlu0 %2487
        %2491 = vset.pattern.permute.xlu0 0
        %2492 = vperm.xlu0 %2491, %v2458
        %v2493 = vpop.permute.xlu0 %2492
        %2496 = vset.pattern.permute.xlu0 0
        %2497 = vperm.xlu0 %2496, %v2459
        %v2498 = vpop.permute.xlu0 %2497
        %2501 = vset.pattern.permute.xlu0 0
        %2502 = vperm.xlu0 %2501, %v2460
        %v2503 = vpop.permute.xlu0 %2502
        %2506 = vset.pattern.permute.xlu0 0
        %2507 = vperm.xlu0 %2506, %v2461
        %v2508 = vpop.permute.xlu0 %2507
        %2511 = vset.pattern.permute.xlu0 0
        %2512 = vperm.xlu0 %2511, %v2462
        %v2513 = vpop.permute.xlu0 %2512
        %2516 = vset.pattern.permute.xlu0 0
        %2517 = vperm.xlu0 %2516, %v2463
        %v2518 = vpop.permute.xlu0 %2517
        %2521 = vset.pattern.permute.xlu0 0
        %2522 = vperm.xlu0 %2521, %v2464
        %v2523 = vpop.permute.xlu0 %2522
        %2526 = vset.pattern.permute.xlu0 0
        %2527 = vperm.xlu0 %2526, %v2465
        %v2528 = vpop.permute.xlu0 %2527
        %2531 = vset.pattern.permute.xlu0 0
        %2532 = vperm.xlu0 %2531, %v2466
        %v2533 = vpop.permute.xlu0 %2532
        %2536 = vset.pattern.permute.xlu0 0
        %2537 = vperm.xlu0 %2536, %v2467
        %v2538 = vpop.permute.xlu0 %2537
        %2541 = vset.pattern.permute.xlu0 0
        %2542 = vperm.xlu0 %2541, %v2468
        %v2543 = vpop.permute.xlu0 %2542
        %2546 = vset.pattern.permute.xlu0 0
        %2547 = vperm.xlu0 %2546, %v2469
        %v2548 = vpop.permute.xlu0 %2547
        %v2550 = vmul.f32 %v2392, %v2473
        %v2551 = vmul.f32 %v2395, %v2478
        %v2552 = vmul.f32 %v2400, %v2483
        %v2553 = vmul.f32 %v2403, %v2488
        %v2554 = vmul.f32 %v2408, %v2493
        %v2555 = vmul.f32 %v2411, %v2498
        %v2556 = vmul.f32 %v2416, %v2503
        %v2557 = vmul.f32 %v2419, %v2508
        %v2558 = vmul.f32 %v2424, %v2513
        %v2559 = vmul.f32 %v2427, %v2518
        %v2560 = vmul.f32 %v2432, %v2523
        %v2561 = vmul.f32 %v2435, %v2528
        %v2562 = vmul.f32 %v2440, %v2533
        %v2563 = vmul.f32 %v2443, %v2538
        %v2564 = vmul.f32 %v2448, %v2543
        %v2565 = vmul.f32 %v2451, %v2548
        %2566 = vset.pattern.permute.xlu0 1
        %2567 = vperm.xlu0 %2566, %v2454
        %v2568 = vpop.permute.xlu0 %2567
        %2570 = vset.pattern.permute.xlu0 1
        %2571 = vperm.xlu0 %2570, %v2455
        %v2572 = vpop.permute.xlu0 %2571
        %2574 = vset.pattern.permute.xlu0 1
        %2575 = vperm.xlu0 %2574, %v2456
        %v2576 = vpop.permute.xlu0 %2575
        %2578 = vset.pattern.permute.xlu0 1
        %2579 = vperm.xlu0 %2578, %v2457
        %v2580 = vpop.permute.xlu0 %2579
        %2582 = vset.pattern.permute.xlu0 1
        %2583 = vperm.xlu0 %2582, %v2458
        %v2584 = vpop.permute.xlu0 %2583
        %2586 = vset.pattern.permute.xlu0 1
        %2587 = vperm.xlu0 %2586, %v2459
        %v2588 = vpop.permute.xlu0 %2587
        %2590 = vset.pattern.permute.xlu0 1
        %2591 = vperm.xlu0 %2590, %v2460
        %v2592 = vpop.permute.xlu0 %2591
        %2594 = vset.pattern.permute.xlu0 1
        %2595 = vperm.xlu0 %2594, %v2461
        %v2596 = vpop.permute.xlu0 %2595
        %2598 = vset.pattern.permute.xlu0 1
        %2599 = vperm.xlu0 %2598, %v2462
        %v2600 = vpop.permute.xlu0 %2599
        %2602 = vset.pattern.permute.xlu0 1
        %2603 = vperm.xlu0 %2602, %v2463
        %v2604 = vpop.permute.xlu0 %2603
        %2606 = vset.pattern.permute.xlu0 1
        %2607 = vperm.xlu0 %2606, %v2464
        %v2608 = vpop.permute.xlu0 %2607
        %2610 = vset.pattern.permute.xlu0 1
        %2611 = vperm.xlu0 %2610, %v2465
        %v2612 = vpop.permute.xlu0 %2611
        %2614 = vset.pattern.permute.xlu0 1
        %2615 = vperm.xlu0 %2614, %v2466
        %v2616 = vpop.permute.xlu0 %2615
        %2618 = vset.pattern.permute.xlu0 1
        %2619 = vperm.xlu0 %2618, %v2467
        %v2620 = vpop.permute.xlu0 %2619
        %2622 = vset.pattern.permute.xlu0 1
        %2623 = vperm.xlu0 %2622, %v2468
        %v2624 = vpop.permute.xlu0 %2623
        %2626 = vset.pattern.permute.xlu0 1
        %2627 = vperm.xlu0 %2626, %v2469
        %v2628 = vpop.permute.xlu0 %2627
        %v2630 = vadd.f32 %v2550, %v2568
        %v2631 = vadd.f32 %v2551, %v2572
        %v2632 = vadd.f32 %v2552, %v2576
        %v2633 = vadd.f32 %v2553, %v2580
        %v2634 = vadd.f32 %v2554, %v2584
        %v2635 = vadd.f32 %v2555, %v2588
        %v2636 = vadd.f32 %v2556, %v2592
        %v2637 = vadd.f32 %v2557, %v2596
        %v2638 = vadd.f32 %v2558, %v2600
        %v2639 = vadd.f32 %v2559, %v2604
        %v2640 = vadd.f32 %v2560, %v2608
        %v2641 = vadd.f32 %v2561, %v2612
        %v2642 = vadd.f32 %v2562, %v2616
        %v2643 = vadd.f32 %v2563, %v2620
        %v2644 = vadd.f32 %v2564, %v2624
        %v2645 = vadd.f32 %v2565, %v2628
        %v2646 = vmul.f32 %v2630, 0.5
        %v2647 = vmul.f32 %v2631, 0.5
        %v2648 = vmul.f32 %v2632, 0.5
        %v2649 = vmul.f32 %v2633, 0.5
        %v2650 = vmul.f32 %v2634, 0.5
        %v2651 = vmul.f32 %v2635, 0.5
        %v2652 = vmul.f32 %v2636, 0.5
        %v2653 = vmul.f32 %v2637, 0.5
        %v2654 = vmul.f32 %v2638, 0.5
        %v2655 = vmul.f32 %v2639, 0.5
        %v2656 = vmul.f32 %v2640, 0.5
        %v2657 = vmul.f32 %v2641, 0.5
        %v2658 = vmul.f32 %v2642, 0.5
        %v2659 = vmul.f32 %v2643, 0.5
        %v2660 = vmul.f32 %v2644, 0.5
        %v2661 = vmul.f32 %v2645, 0.5
        %v2662 = vmul.f32 %v2630, 0.70710677
        %v2663 = vmul.f32 %v2631, 0.70710677
        %v2664 = vmul.f32 %v2632, 0.70710677
        %v2665 = vmul.f32 %v2633, 0.70710677
        %v2666 = vmul.f32 %v2634, 0.70710677
        %v2667 = vmul.f32 %v2635, 0.70710677
        %v2668 = vmul.f32 %v2636, 0.70710677
        %v2669 = vmul.f32 %v2637, 0.70710677
        %v2670 = vmul.f32 %v2638, 0.70710677
        %v2671 = vmul.f32 %v2639, 0.70710677
        %v2672 = vmul.f32 %v2640, 0.70710677
        %v2673 = vmul.f32 %v2641, 0.70710677
        %v2674 = vmul.f32 %v2642, 0.70710677
        %v2675 = vmul.f32 %v2643, 0.70710677
        %v2676 = vmul.f32 %v2644, 0.70710677
        %v2677 = vmul.f32 %v2645, 0.70710677
        %v2678 = verf.f32.pop %v2662
        %v2679 = verf.f32.pop %v2663
        %v2680 = verf.f32.pop %v2664
        %v2681 = verf.f32.pop %v2665
        %v2682 = verf.f32.pop %v2666
        %v2683 = verf.f32.pop %v2667
        %v2684 = verf.f32.pop %v2668
        %v2685 = verf.f32.pop %v2669
        %v2686 = verf.f32.pop %v2670
        %v2687 = verf.f32.pop %v2671
        %v2688 = verf.f32.pop %v2672
        %v2689 = verf.f32.pop %v2673
        %v2690 = verf.f32.pop %v2674
        %v2691 = verf.f32.pop %v2675
        %v2692 = verf.f32.pop %v2676
        %v2693 = verf.f32.pop %v2677
        %v2694 = vadd.f32 %v2678, 1.0
        %v2695 = vadd.f32 %v2679, 1.0
        %v2696 = vadd.f32 %v2680, 1.0
        %v2697 = vadd.f32 %v2681, 1.0
        %v2698 = vadd.f32 %v2682, 1.0
        %v2699 = vadd.f32 %v2683, 1.0
        %v2700 = vadd.f32 %v2684, 1.0
        %v2701 = vadd.f32 %v2685, 1.0
        %v2702 = vadd.f32 %v2686, 1.0
        %v2703 = vadd.f32 %v2687, 1.0
        %v2704 = vadd.f32 %v2688, 1.0
        %v2705 = vadd.f32 %v2689, 1.0
        %v2706 = vadd.f32 %v2690, 1.0
        %v2707 = vadd.f32 %v2691, 1.0
        %v2708 = vadd.f32 %v2692, 1.0
        %v2709 = vadd.f32 %v2693, 1.0
        %v2710 = vmul.f32 %v2646, %v2694
        %v2711 = vmul.f32 %v2647, %v2695
        %v2712 = vmul.f32 %v2648, %v2696
        %v2713 = vmul.f32 %v2649, %v2697
        %v2714 = vmul.f32 %v2650, %v2698
        %v2715 = vmul.f32 %v2651, %v2699
        %v2716 = vmul.f32 %v2652, %v2700
        %v2717 = vmul.f32 %v2653, %v2701
        %v2718 = vmul.f32 %v2654, %v2702
        %v2719 = vmul.f32 %v2655, %v2703
        %v2720 = vmul.f32 %v2656, %v2704
        %v2721 = vmul.f32 %v2657, %v2705
        %v2722 = vmul.f32 %v2658, %v2706
        %v2723 = vmul.f32 %v2659, %v2707
        %v2724 = vmul.f32 %v2660, %v2708
        %v2725 = vmul.f32 %v2661, %v2709
        %v2726 = vpack.c.bf16 %v2711, %v2710
        %v2727 = vpack.c.bf16 %v2713, %v2712
        %v2728 = vpack.c.bf16 %v2715, %v2714
        %v2729 = vpack.c.bf16 %v2717, %v2716
        %v2730 = vpack.c.bf16 %v2719, %v2718
        %v2731 = vpack.c.bf16 %v2721, %v2720
        %v2732 = vpack.c.bf16 %v2723, %v2722
        %v2733 = vpack.c.bf16 %v2725, %v2724
        %v2734 = vld [vmem:[%s9] sm:$0xf]
        %v2735 = vld [vmem:[%s10] sm:$0xff]
        %2737 = vset.pattern.permute.xlu0 1
        %2738 = vperm.xlu0 %2737, %v2735
        %v2739 = vpop.permute.xlu0 %2738
        %2741 = vmatprep.subr.bf16.mxu0 0
        %2742 = vmatpush1.bf16.msra.mxu0 %v2726
        %2743 = vmatprep.subr.bf16.mxu0 0
        %2744 = vmatpush1.bf16.msra.mxu0 %v2727
        %2745 = vmatprep.subr.bf16.mxu0 0
        %2746 = vmatpush1.bf16.msra.mxu0 %v2728
        %2747 = vmatprep.subr.bf16.mxu0 0
        %2748 = vmatpush1.bf16.msra.mxu0 %v2729
        %2749 = vmatprep.subr.bf16.mxu0 0
        %2750 = vmatpush1.bf16.msra.mxu0 %v2730
        %2751 = vmatprep.subr.bf16.mxu0 0
        %2752 = vmatpush1.bf16.msra.mxu0 %v2731
        %2753 = vmatprep.subr.bf16.mxu0 0
        %2754 = vmatpush1.bf16.msra.mxu0 %v2732
        %2755 = vmatprep.subr.bf16.mxu0 0
        %2756 = vmatpush1.bf16.msra.mxu0 %v2733
        %2757 = vmatprep.subr.bf16.mxu0 0
        %2758 = vmatpush1.bf16.msra.mxu0 0
        %2759 = vmatprep.subr.bf16.mxu0 0
        %2760 = vmatpush1.bf16.msra.mxu0 0
        %2761 = vmatprep.subr.bf16.mxu0 0
        %2762 = vmatpush1.bf16.msra.mxu0 0
        %2763 = vmatprep.subr.bf16.mxu0 0
        %2764 = vmatpush1.bf16.msra.mxu0 0
        %2765 = vmatprep.subr.bf16.mxu0 0
        %2766 = vmatpush1.bf16.msra.mxu0 0
        %2767 = vmatprep.subr.bf16.mxu0 0
        %2768 = vmatpush1.bf16.msra.mxu0 0
        %2769 = vmatprep.subr.bf16.mxu0 0
        %2770 = vmatpush1.bf16.msra.mxu0 0
        %2771 = vmatprep.subr.bf16.mxu0 0
        %2772 = vmatpush1.bf16.msra.mxu0 0
        %2773 = vmatprep.mubr.bf16.mxu0 0
        %2774 = vmatmul.mubr.bf16.gmra.mrb[0].mxu0 %v2734
        %v2775 = vpop.f32.mrb[0].mxu0
        %v2776 = vadd.f32 %v2739, %v2775
        %v2777 = vpop.f32.mrb[0].mxu0
        %v2778 = vpop.f32.mrb[0].mxu0
        %v2779 = vpop.f32.mrb[0].mxu0
        %2780 = vdwg.mxu0
        %v2781 = vadd.f32 %v383, %v2776
        %2782 = vst [vmem:[%s377] sm:$0xff] %v2781
        %s2783 = sand.u32 %s269, 1
        %s2784 = scalar_lea.sflag [#allocation3], %s2783
        %s2785 = sand.u32 %s269, 1
        %s2786 = smul.addr %s2785, 8
        %s2787 = scalar_lea.vmem [#allocation2], %s2786
        // Predicated region
        $region65: #{tpu_custom_call.1} parent=63 // pred_check
          %p2788 = pneg %p279
        $region66: #{tpu_custom_call.1} parent=63 // pred_check_branch
          %2790 = sbr.rel (%p2788) target = $region68
        $region67: #{tpu_custom_call.1} parent=63 // pred_region
          %s2792 = ssub.s32 128, 128
          %2793 = vsyncadd %s2784, %s2792
          %s2794 = smul.addr %s25, 128
          %s2795 = scalar_lea.hbm %s11, %s2794
          %s2797 = sshll.u32 %s2787, 4
          %s2798 = int_to_ptr.vmem [resolvable:$true] %s2797
          %2800 = dma.vmem_to_hbm [thread:$0]  %s2798, 128, %s2795, %s2784
        $region68: #{tpu_custom_call.1} parent=63 // pred_fallthru
          _
      $region64: #{tpu_custom_call.1} parent=5 // pred_fallthru
        _
      %p2801 = scmp.le.s32.totalorder 2, %s20
      // Predicated region
      $region69: #{tpu_custom_call.1} parent=5 // pred_check
        %p2802 = pneg %p2801
      $region70: #{tpu_custom_call.1} parent=5 // pred_check_branch
        %2804 = sbr.rel (%p2802) target = $region72
      $region71: #{tpu_custom_call.1} parent=5 // pred_region
        %s2805 = ssub.s32 %s20, 2
        // Predicated region
        $region73: #{tpu_custom_call.1} parent=71 // pred_check
          %p2806 = pneg %p285
        $region74: #{tpu_custom_call.1} parent=71 // pred_check_branch
          %2808 = sbr.rel (%p2806) target = $region76
        $region75: #{tpu_custom_call.1} parent=71 // pred_region
          %s2809 = sand.u32 %s270, 1
          %s2810 = scalar_lea.sflag [#allocation3], %s2809
          %s2811 = sand.u32 %s270, 1
          %s2812 = smul.addr %s2811, 8
          %s2813 = scalar_lea.vmem [#allocation2], %s2812
          %2814 = dma.done %s2810, 128
        $region76: #{tpu_custom_call.1} parent=71 // pred_fallthru
          _
      $region72: #{tpu_custom_call.1} parent=5 // pred_fallthru
        _
    $region6: #{tpu_custom_call.1} parent=1 // loop_footer
      %s24 = sadd.s32 1, %s20
    $region7: #{tpu_custom_call.1} parent=1 // loop_footer_branch
      %19 = sbr.rel target = $region3
    $region8: #{tpu_custom_call.1} parent=1 // loop_exit
      _
    %2815 = vsyncpa [#allocation3], 1
    %s2816 = scalar_lea.sflag [#allocation3], 1
    %2817 = vsyncpa %s2816, 1

</llo_original>
